<compile_context>
chip_gen: v5e
topology: v5e:2x2
jax: 0.10.0
libtpu: 0.0.40
codegen_flags: <defaults>
</compile_context>

<pallas_src>
import math
import numpy as np
import jax
import jax.numpy as jnp
from jax.experimental import pallas as pl
from jax.experimental.pallas import tpu as pltpu

LN_EPS = 1e-5
_MXU_DTYPE = jnp.bfloat16


def _layer_norm(x, gamma, beta):
    mean = jnp.mean(x, axis=-1, keepdims=True)
    var = jnp.mean((x - mean) ** 2, axis=-1, keepdims=True)
    return (x - mean) * jax.lax.rsqrt(var + LN_EPS) * gamma + beta


# ----------------------------------------------------------------------------
# Fused encoder-layer kernel (MHA sublayer + FFN sublayer in one pallas_call)
# ----------------------------------------------------------------------------
def _make_encoder_layer_kernel(num_heads, mxu_dtype):
    inv_sqrt2 = 1.0 / math.sqrt(2.0)

    def kernel(x_ref,
               wqkv_ref, bqkv_ref, wo_ref, bo_ref, ln1_g_ref, ln1_b_ref,
               w1_ref, b1_ref, w2_ref, b2_ref, ln2_g_ref, ln2_b_ref,
               o_ref):
        L, bn, D = x_ref.shape            # (attended axis, batch block, d_model)
        H = num_heads
        hd = D // H
        scale = 1.0 / math.sqrt(hd)

        def mm(a, w_ref):                 # bf16 MXU operands, fp32 accumulation
            return jnp.dot(a.astype(mxu_dtype), w_ref[...],
                           preferred_element_type=jnp.float32)

        # In-VMEM sublane reorder to batch-leading rows; replaces the two wrapper
        # HBM transposes of the previous version (2 full HBM passes saved).
        xb = jnp.transpose(x_ref[...], (1, 0, 2))          # (bn, L, D), rows (b, l)
        x2 = xb.reshape(bn * L, D)                          # fp32 (residual/LN input)

        # ---- fused QKV projection: one (bn*L, D) @ (D, 3D) matmul ----
        # Cast to bf16 right after the bias add: halves the q/k/v temporaries.
        qkv = (mm(x2, wqkv_ref) + bqkv_ref[...]).astype(mxu_dtype)
        qkv3 = qkv.reshape(bn, L, 3 * D)

        # ---- fold (head, batch) into one leading batch dim -> (H*bn, L, hd) ----
        # (small static loop is data arrangement only; each slice is 128-aligned when
        #  head_dim is a multiple of 128 — see TODO for the hd<128 padding path)
        def fold_heads(base):
            return jnp.concatenate(
                [qkv3[:, :, base + h * hd: base + (h + 1) * hd] for h in range(H)],
                axis=0)

        qb = fold_heads(0)                                  # (H*bn, L, hd) bf16
        kb = fold_heads(D)
        vb = fold_heads(2 * D)

        # ---- scores: contract last dims directly (no transpose, leading batch) ----
        s = jax.lax.dot_general(
            qb, kb, dimension_numbers=(((2,), (2,)), ((0,), (0,))),
            preferred_element_type=jnp.float32) * scale     # (H*bn, L, L) fp32

        # attn_mask is None in EncoderLayer -> no mask add
        s = s - jnp.max(s, axis=-1, keepdims=True)
        p = jnp.exp(s)
        p = p * pl.reciprocal(jnp.sum(p, axis=-1, keepdims=True), approx=True)

        ctx_b = jax.lax.dot_general(
            p.astype(mxu_dtype), vb,
            dimension_numbers=(((2,), (1,)), ((0,), (0,))),
            preferred_element_type=jnp.float32)             # (H*bn, L, hd) fp32

        # ---- reassemble heads on the lane dim (lane-dense, whole-block stores) ----
        ctx = jnp.concatenate(
            [ctx_b[h * bn:(h + 1) * bn] for h in range(H)], axis=-1)   # (bn, L, D)
        attn = mm(ctx.reshape(bn * L, D), wo_ref) + bo_ref[...]

        # ---- residual (uses the query, i.e. x) + LayerNorm ----
        h1 = _layer_norm(x2 + attn, ln1_g_ref[...], ln1_b_ref[...])

        # ---- position-wise FFN with exact-erf GELU ----
        f = mm(h1, w1_ref) + b1_ref[...]
        f = 0.5 * f * (1.0 + jax.lax.erf(f * inv_sqrt2))
        y = mm(f, w2_ref) + b2_ref[...]

        out = _layer_norm(h1 + y, ln2_g_ref[...], ln2_b_ref[...])
        # nn.Dropout / attention dropout -> identity in the deterministic forward.
        # Swap rows back to the original (seq, batch) order and store whole block.
        o_ref[...] = jnp.transpose(out.reshape(bn, L, D), (1, 0, 2)).astype(o_ref.dtype)

    return kernel


# ----------------------------------------------------------------------------
# Wrapper: pallas_call plumbing
# ----------------------------------------------------------------------------
def _const_spec(a, single_buffer):
    """Full-array block whose index never changes across the grid."""
    nd = a.ndim
    idx = lambda i: (0,) * nd
    if single_buffer:
        try:
            # Constant block -> no need for double buffering (saves VMEM for big weights).
            return pl.BlockSpec(a.shape, idx, pipeline_mode=pl.Buffered(1))
        except TypeError:
            pass
    return pl.BlockSpec(a.shape, idx)


def _default_vmem_limit():
    cap = 64 * 1024 * 1024                      # conservative fallback (v7x physical)
    try:
        cap = int(pltpu.get_tpu_info().vmem_capacity_bytes)
    except Exception:
        pass
    # ~96 MiB on 128-MiB parts (v5e/v6e), ~48 MiB on the 64-MiB part (v7x).
    return max(32 * 1024 * 1024, min(int(cap * 0.75), 100 * 1024 * 1024))


def _pick_block_b(S, B, D, d_ffn, H, vmem_limit, wbytes=2):
    """Largest batch block (valid w.r.t. the (8,128) rule) whose working set fits."""
    weight_bytes = (4 * D * D + 2 * D * d_ffn) * wbytes + 16 * D * 4
    budget = int(0.8 * vmem_limit) - weight_bytes
    candidates = [d for d in range(B, 0, -1)
                  if B % d == 0 and (d == B or d % 8 == 0)]
    for bb in candidates:                        # largest first -> fills the MXU M dim
        rows = bb * S
        act = (rows * D * 4 * 3                          # x block (2 bufs) + residual
               + rows * 3 * D * (4 + 2 * wbytes)         # qkv fp32 temp + bf16 copies
               + H * bb * S * S * (4 + 4 + wbytes)       # scores + p fp32 + p bf16
               + rows * D * 4 * 3                        # ctx, attn, h1
               + rows * d_ffn * 4 * 2                    # FFN intermediate + GELU
               + rows * D * 4 * 4)                       # y, out, out block (2 bufs)
        if act <= budget:
            return bb
    return candidates[-1]   # best effort; TODO(synk): flash/K-tiling for this regime


def encoder_layer_forward(x, pk, num_heads, *, block_b=None):
    """x: (S, B, d_model); attention mixes along axis 0 (PyTorch nn.MultiheadAttention
    with batch_first=False).  Returns the same shape."""
    S, B, D = x.shape
    assert D % num_heads == 0
    mxu_dtype = pk["wqkv_t"].dtype
    d_ffn = pk["w1_t"].shape[1]

    vmem_limit = _default_vmem_limit()
    if block_b is None:
        block_b = _pick_block_b(S, B, D, d_ffn, num_heads, vmem_limit)
    assert B % block_b == 0

    w_args = (pk["wqkv_t"], pk["bqkv"], pk["wo_t"], pk["bo"],
              pk["ln1_g"], pk["ln1_b"],
              pk["w1_t"], pk["b1"], pk["w2_t"], pk["b2"],
              pk["ln2_g"], pk["ln2_b"])

    io_spec = pl.BlockSpec((S, block_b, D), lambda i: (0, i, 0))

    def run(single_buffer_weights):
        return pl.pallas_call(
            _make_encoder_layer_kernel(num_heads, mxu_dtype),
            out_shape=jax.ShapeDtypeStruct((S, B, D), jnp.float32),
            grid=(B // block_b,),
            in_specs=[io_spec] + [_const_spec(a, single_buffer_weights)
                                  for a in w_args],
            out_specs=io_spec,
            compiler_params=pltpu.CompilerParams(
                dimension_semantics=("parallel",),   # shard batch across v7x's 2 TCs
                vmem_limit_bytes=int(vmem_limit)),
        )(x, *w_args)

    try:
        return run(True)
    except Exception:
        # pl.Buffered(1) not supported by this jax build -> default double buffering.
        return run(False)


# ----------------------------------------------------------------------------
# Parameters: fp32 master weights + one-time packing (transpose, fuse QKV, bf16)
# ----------------------------------------------------------------------------
def init_encoder_layer_params(key, d_model, num_heads, d_ffn):
    keys = iter(jax.random.split(key, 12))

    def nrm(shape, scale=0.05):
        return (scale * jax.random.normal(next(keys), shape)).astype(jnp.float32)

    return dict(
        wq=nrm((d_model, d_model)), wk=nrm((d_model, d_model)),
        wv=nrm((d_model, d_model)),
        bq=nrm((d_model,)), bk=nrm((d_model,)), bv=nrm((d_model,)),
        wo=nrm((d_model, d_model)), bo=nrm((d_model,)),
        ln1_g=jnp.ones((d_model,), jnp.float32),
        ln1_b=jnp.zeros((d_model,), jnp.float32),
        w1=nrm((d_ffn, d_model)), b1=nrm((d_ffn,)),
        w2=nrm((d_model, d_ffn)), b2=nrm((d_model,)),
        ln2_g=jnp.ones((d_model,), jnp.float32),
        ln2_b=jnp.zeros((d_model,), jnp.float32),
    )


def pack_encoder_layer_params(p, mxu_dtype=_MXU_DTYPE):
    """One-time weight prep: transpose, fuse QKV, cast MXU operands to bf16."""
    f32 = jnp.float32
    return dict(
        wqkv_t=jnp.concatenate([p["wq"].T, p["wk"].T, p["wv"].T],
                               axis=1).astype(mxu_dtype),            # (D, 3D)
        bqkv=jnp.concatenate([p["bq"], p["bk"], p["bv"]])[None, :].astype(f32),
        wo_t=p["wo"].T.astype(mxu_dtype),
        bo=p["bo"][None, :].astype(f32),
        ln1_g=p["ln1_g"][None, :].astype(f32),
        ln1_b=p["ln1_b"][None, :].astype(f32),
        w1_t=p["w1"].T.astype(mxu_dtype),
        b1=p["b1"][None, :].astype(f32),
        w2_t=p["w2"].T.astype(mxu_dtype),
        b2=p["b2"][None, :].astype(f32),
        ln2_g=p["ln2_g"][None, :].astype(f32),
        ln2_b=p["ln2_b"][None, :].astype(f32),
    )


# ----------------------------------------------------------------------------
# Pure-JAX reference (same packed weights / same bf16 MXU operands)
# ----------------------------------------------------------------------------
def encoder_layer_ref(x, pk, num_heads):
    S, B, D = x.shape
    H = num_heads
    hd = D // H
    mx = pk["wqkv_t"].dtype

    def mm(a, w):
        return jnp.dot(a.astype(mx), w, preferred_element_type=jnp.float32)

    x2 = x.reshape(S * B, D)
    qkv = mm(x2, pk["wqkv_t"]) + pk["bqkv"]
    q = qkv[:, :D].reshape(S, B, H, hd)
    k = qkv[:, D:2 * D].reshape(S, B, H, hd)
    v = qkv[:, 2 * D:].reshape(S, B, H, hd)
    s = jnp.einsum("qbhd,kbhd->bhqk", q.astype(mx), k.astype(mx),
                   preferred_element_type=jnp.float32) / math.sqrt(hd)
    p = jax.nn.softmax(s, axis=-1)
    ctx = jnp.einsum("bhqk,kbhd->qbhd", p.astype(mx), v.astype(mx),
                     preferred_element_type=jnp.float32).reshape(S * B, D)
    attn = mm(ctx, pk["wo_t"]) + pk["bo"]
    h1 = _layer_norm(x2 + attn, pk["ln1_g"], pk["ln1_b"])
    f = mm(h1, pk["w1_t"]) + pk["b1"]
    f = 0.5 * f * (1.0 + jax.lax.erf(f / math.sqrt(2.0)))
    y = mm(f, pk["w2_t"]) + pk["b2"]
    out = _layer_norm(h1 + y, pk["ln2_g"], pk["ln2_b"])
    return out.reshape(S, B, D)


# ----------------------------------------------------------------------------
if __name__ == "__main__":
    # nn.MultiheadAttention default layout: (seq, batch, d_model) = (axis0, axis1, D).
    # Small demo shapes; production shapes should use d_model / head_dim multiples
    # of 128 and block_b*S >= 128/256 for meaningful MXU utilization (see review).
    S, B = 8, 2
    d_model, num_heads, d_ffn = 32, 4, 64
    # dropout -> identity (deterministic eval forward)

    key = jax.random.PRNGKey(0)
    k_p, k_x = jax.random.split(key)
    master = init_encoder_layer_params(k_p, d_model, num_heads, d_ffn)
    packed = pack_encoder_layer_params(master)

    x = jax.random.normal(k_x, (S, B, d_model), dtype=jnp.float32)

    out = jax.block_until_ready(encoder_layer_forward(x, packed, num_heads))

    ref = encoder_layer_ref(x, packed, num_heads)
    # bf16 MXU operands + approx reciprocal in the kernel softmax -> loose-ish tol
    np.testing.assert_allclose(np.asarray(out), np.asarray(ref), rtol=1e-2, atol=1e-2)

    print("KERNEL_OK")
</pallas_src>

<mosaic_0001>
module attributes {stable_mosaic.version = 11 : i64} {
  func.func @kernel(%arg0: i32, %arg1: memref<8x2x32xf32, #tpu.memory_space<vmem>>, %arg2: memref<32x96xbf16, #tpu.memory_space<vmem>>, %arg3: memref<1x96xf32, #tpu.memory_space<vmem>>, %arg4: memref<32x32xbf16, #tpu.memory_space<vmem>>, %arg5: memref<1x32xf32, #tpu.memory_space<vmem>>, %arg6: memref<1x32xf32, #tpu.memory_space<vmem>>, %arg7: memref<1x32xf32, #tpu.memory_space<vmem>>, %arg8: memref<32x64xbf16, #tpu.memory_space<vmem>>, %arg9: memref<1x64xf32, #tpu.memory_space<vmem>>, %arg10: memref<64x32xbf16, #tpu.memory_space<vmem>>, %arg11: memref<1x32xf32, #tpu.memory_space<vmem>>, %arg12: memref<1x32xf32, #tpu.memory_space<vmem>>, %arg13: memref<1x32xf32, #tpu.memory_space<vmem>>, %arg14: memref<8x2x32xf32, #tpu.memory_space<vmem>>) attributes {dimension_semantics = [#tpu.dimension_semantics<parallel>], iteration_bounds = array<i64: 1>, scalar_prefetch = 0 : i64, scratch_operands = 0 : i64, tpu.core_type = #tpu.core_type<tc>, window_params = [{transform_indices = @transform_0, window_bounds = array<i64: 8, 2, 32>}, {pipeline_mode = #tpu.pipeline_mode<synchronous>, transform_indices = @transform_1, window_bounds = array<i64: 32, 96>}, {pipeline_mode = #tpu.pipeline_mode<synchronous>, transform_indices = @transform_2, window_bounds = array<i64: 1, 96>}, {pipeline_mode = #tpu.pipeline_mode<synchronous>, transform_indices = @transform_3, window_bounds = array<i64: 32, 32>}, {pipeline_mode = #tpu.pipeline_mode<synchronous>, transform_indices = @transform_4, window_bounds = array<i64: 1, 32>}, {pipeline_mode = #tpu.pipeline_mode<synchronous>, transform_indices = @transform_5, window_bounds = array<i64: 1, 32>}, {pipeline_mode = #tpu.pipeline_mode<synchronous>, transform_indices = @transform_6, window_bounds = array<i64: 1, 32>}, {pipeline_mode = #tpu.pipeline_mode<synchronous>, transform_indices = @transform_7, window_bounds = array<i64: 32, 64>}, {pipeline_mode = #tpu.pipeline_mode<synchronous>, transform_indices = @transform_8, window_bounds = array<i64: 1, 64>}, {pipeline_mode = #tpu.pipeline_mode<synchronous>, transform_indices = @transform_9, window_bounds = array<i64: 64, 32>}, {pipeline_mode = #tpu.pipeline_mode<synchronous>, transform_indices = @transform_10, window_bounds = array<i64: 1, 32>}, {pipeline_mode = #tpu.pipeline_mode<synchronous>, transform_indices = @transform_11, window_bounds = array<i64: 1, 32>}, {pipeline_mode = #tpu.pipeline_mode<synchronous>, transform_indices = @transform_12, window_bounds = array<i64: 1, 32>}, {transform_indices = @transform_13, window_bounds = array<i64: 8, 2, 32>}]} {
    %c0 = arith.constant 0 : index
    %c0_0 = arith.constant 0 : index
    %c0_1 = arith.constant 0 : index
    %0 = vector.load %arg1[%c0, %c0_0, %c0_1] : memref<8x2x32xf32, #tpu.memory_space<vmem>>, vector<8x2x32xf32>
    %1 = tpu.transpose %0, [1, 0, 2] : vector<8x2x32xf32> -> vector<2x8x32xf32>
    %2 = vector.shape_cast %1 : vector<2x8x32xf32> to vector<16x32xf32>
    %3 = arith.truncf %2 : vector<16x32xf32> to vector<16x32xbf16>
    %c0_2 = arith.constant 0 : index
    %c0_3 = arith.constant 0 : index
    %4 = vector.load %arg2[%c0_2, %c0_3] : memref<32x96xbf16, #tpu.memory_space<vmem>>, vector<32x96xbf16>
    %cst = arith.constant dense<0.000000e+00> : vector<16x96xf32>
    %5 = tpu.matmul %3, %4, %cst {dimension_numbers = #tpu.dot_dimension_numbers<[1], [0], [0], [1], [0, 0, 1, 1], [], []>} : vector<16x32xbf16>, vector<32x96xbf16>, vector<16x96xf32> -> vector<16x96xf32>
    %c0_4 = arith.constant 0 : index
    %c0_5 = arith.constant 0 : index
    %6 = vector.load %arg3[%c0_4, %c0_5] : memref<1x96xf32, #tpu.memory_space<vmem>>, vector<1x96xf32>
    %7 = vector.broadcast %6 : vector<1x96xf32> to vector<16x96xf32>
    %8 = arith.addf %5, %7 : vector<16x96xf32>
    %9 = arith.truncf %8 : vector<16x96xf32> to vector<16x96xbf16>
    %10 = vector.shape_cast %9 : vector<16x96xbf16> to vector<2x8x96xbf16>
    %11 = vector.extract_strided_slice %10 {offsets = [0, 0, 0], sizes = [2, 8, 8], strides = [1, 1, 1]} : vector<2x8x96xbf16> to vector<2x8x8xbf16>
    %12 = vector.extract_strided_slice %10 {offsets = [0, 0, 8], sizes = [2, 8, 8], strides = [1, 1, 1]} : vector<2x8x96xbf16> to vector<2x8x8xbf16>
    %13 = vector.extract_strided_slice %10 {offsets = [0, 0, 16], sizes = [2, 8, 8], strides = [1, 1, 1]} : vector<2x8x96xbf16> to vector<2x8x8xbf16>
    %14 = vector.extract_strided_slice %10 {offsets = [0, 0, 24], sizes = [2, 8, 8], strides = [1, 1, 1]} : vector<2x8x96xbf16> to vector<2x8x8xbf16>
    %15 = tpu.concatenate %11, %12, %13, %14 in 0 : vector<2x8x8xbf16>, vector<2x8x8xbf16>, vector<2x8x8xbf16>, vector<2x8x8xbf16> -> vector<8x8x8xbf16>
    %16 = vector.extract_strided_slice %10 {offsets = [0, 0, 32], sizes = [2, 8, 8], strides = [1, 1, 1]} : vector<2x8x96xbf16> to vector<2x8x8xbf16>
    %17 = vector.extract_strided_slice %10 {offsets = [0, 0, 40], sizes = [2, 8, 8], strides = [1, 1, 1]} : vector<2x8x96xbf16> to vector<2x8x8xbf16>
    %18 = vector.extract_strided_slice %10 {offsets = [0, 0, 48], sizes = [2, 8, 8], strides = [1, 1, 1]} : vector<2x8x96xbf16> to vector<2x8x8xbf16>
    %19 = vector.extract_strided_slice %10 {offsets = [0, 0, 56], sizes = [2, 8, 8], strides = [1, 1, 1]} : vector<2x8x96xbf16> to vector<2x8x8xbf16>
    %20 = tpu.concatenate %16, %17, %18, %19 in 0 : vector<2x8x8xbf16>, vector<2x8x8xbf16>, vector<2x8x8xbf16>, vector<2x8x8xbf16> -> vector<8x8x8xbf16>
    %21 = vector.extract_strided_slice %10 {offsets = [0, 0, 64], sizes = [2, 8, 8], strides = [1, 1, 1]} : vector<2x8x96xbf16> to vector<2x8x8xbf16>
    %22 = vector.extract_strided_slice %10 {offsets = [0, 0, 72], sizes = [2, 8, 8], strides = [1, 1, 1]} : vector<2x8x96xbf16> to vector<2x8x8xbf16>
    %23 = vector.extract_strided_slice %10 {offsets = [0, 0, 80], sizes = [2, 8, 8], strides = [1, 1, 1]} : vector<2x8x96xbf16> to vector<2x8x8xbf16>
    %24 = vector.extract_strided_slice %10 {offsets = [0, 0, 88], sizes = [2, 8, 8], strides = [1, 1, 1]} : vector<2x8x96xbf16> to vector<2x8x8xbf16>
    %25 = tpu.concatenate %21, %22, %23, %24 in 0 : vector<2x8x8xbf16>, vector<2x8x8xbf16>, vector<2x8x8xbf16>, vector<2x8x8xbf16> -> vector<8x8x8xbf16>
    %cst_6 = arith.constant dense<0.000000e+00> : vector<8x8x8xf32>
    %26 = tpu.matmul %15, %20, %cst_6 {dimension_numbers = #tpu.dot_dimension_numbers<[2], [2], [1], [1], [0, 0, 0, 1, 1, 1], [0], [0]>} : vector<8x8x8xbf16>, vector<8x8x8xbf16>, vector<8x8x8xf32> -> vector<8x8x8xf32>
    %cst_7 = arith.constant 0.353553385 : f32
    %27 = vector.broadcast %cst_7 : f32 to vector<8x8x8xf32>
    %28 = arith.mulf %26, %27 : vector<8x8x8xf32>
    %cst_8 = arith.constant dense<0xFF800000> : vector<8x8xf32>
    %29 = vector.multi_reduction <maximumf>, %28, %cst_8 [2] : vector<8x8x8xf32> to vector<8x8xf32>
    %30 = vector.shape_cast %29 : vector<8x8xf32> to vector<8x8x1xf32>
    %31 = vector.broadcast %30 : vector<8x8x1xf32> to vector<8x8x8xf32>
    %32 = arith.subf %28, %31 : vector<8x8x8xf32>
    %33 = math.exp %32 : vector<8x8x8xf32>
    %cst_9 = arith.constant dense<0.000000e+00> : vector<8x8xf32>
    %34 = vector.multi_reduction <add>, %33, %cst_9 [2] : vector<8x8x8xf32> to vector<8x8xf32>
    %35 = vector.shape_cast %34 : vector<8x8xf32> to vector<8x8x1xf32>
    %36 = tpu.reciprocal %35 {approx = true} : vector<8x8x1xf32> -> vector<8x8x1xf32>
    %37 = vector.broadcast %36 : vector<8x8x1xf32> to vector<8x8x8xf32>
    %38 = arith.mulf %33, %37 : vector<8x8x8xf32>
    %39 = arith.truncf %38 : vector<8x8x8xf32> to vector<8x8x8xbf16>
    %cst_10 = arith.constant dense<0.000000e+00> : vector<8x8x8xf32>
    %40 = tpu.matmul %39, %25, %cst_10 {dimension_numbers = #tpu.dot_dimension_numbers<[2], [1], [1], [2], [0, 0, 0, 1, 1, 2], [0], [0]>} : vector<8x8x8xbf16>, vector<8x8x8xbf16>, vector<8x8x8xf32> -> vector<8x8x8xf32>
    %41 = vector.extract_strided_slice %40 {offsets = [0, 0, 0], sizes = [2, 8, 8], strides = [1, 1, 1]} : vector<8x8x8xf32> to vector<2x8x8xf32>
    %42 = vector.extract_strided_slice %40 {offsets = [2, 0, 0], sizes = [2, 8, 8], strides = [1, 1, 1]} : vector<8x8x8xf32> to vector<2x8x8xf32>
    %43 = vector.extract_strided_slice %40 {offsets = [4, 0, 0], sizes = [2, 8, 8], strides = [1, 1, 1]} : vector<8x8x8xf32> to vector<2x8x8xf32>
    %44 = vector.extract_strided_slice %40 {offsets = [6, 0, 0], sizes = [2, 8, 8], strides = [1, 1, 1]} : vector<8x8x8xf32> to vector<2x8x8xf32>
    %45 = tpu.concatenate %41, %42, %43, %44 in 2 : vector<2x8x8xf32>, vector<2x8x8xf32>, vector<2x8x8xf32>, vector<2x8x8xf32> -> vector<2x8x32xf32>
    %46 = vector.shape_cast %45 : vector<2x8x32xf32> to vector<16x32xf32>
    %47 = arith.truncf %46 : vector<16x32xf32> to vector<16x32xbf16>
    %c0_11 = arith.constant 0 : index
    %c0_12 = arith.constant 0 : index
    %48 = vector.load %arg4[%c0_11, %c0_12] : memref<32x32xbf16, #tpu.memory_space<vmem>>, vector<32x32xbf16>
    %cst_13 = arith.constant dense<0.000000e+00> : vector<16x32xf32>
    %49 = tpu.matmul %47, %48, %cst_13 {dimension_numbers = #tpu.dot_dimension_numbers<[1], [0], [0], [1], [0, 0, 1, 1], [], []>} : vector<16x32xbf16>, vector<32x32xbf16>, vector<16x32xf32> -> vector<16x32xf32>
    %c0_14 = arith.constant 0 : index
    %c0_15 = arith.constant 0 : index
    %50 = vector.load %arg5[%c0_14, %c0_15] : memref<1x32xf32, #tpu.memory_space<vmem>>, vector<1x32xf32>
    %51 = vector.broadcast %50 : vector<1x32xf32> to vector<16x32xf32>
    %52 = arith.addf %49, %51 : vector<16x32xf32>
    %53 = arith.addf %2, %52 : vector<16x32xf32>
    %c0_16 = arith.constant 0 : index
    %c0_17 = arith.constant 0 : index
    %54 = vector.load %arg6[%c0_16, %c0_17] : memref<1x32xf32, #tpu.memory_space<vmem>>, vector<1x32xf32>
    %c0_18 = arith.constant 0 : index
    %c0_19 = arith.constant 0 : index
    %55 = vector.load %arg7[%c0_18, %c0_19] : memref<1x32xf32, #tpu.memory_space<vmem>>, vector<1x32xf32>
    %cst_20 = arith.constant dense<0.000000e+00> : vector<16xf32>
    %56 = vector.multi_reduction <add>, %53, %cst_20 [1] : vector<16x32xf32> to vector<16xf32>
    %57 = vector.shape_cast %56 : vector<16xf32> to vector<16x1xf32>
    %cst_21 = arith.constant 3.200000e+01 : f32
    %58 = vector.broadcast %cst_21 : f32 to vector<16x1xf32>
    %59 = arith.divf %57, %58 : vector<16x1xf32>
    %60 = vector.broadcast %59 : vector<16x1xf32> to vector<16x32xf32>
    %61 = arith.subf %53, %60 : vector<16x32xf32>
    %62 = arith.mulf %61, %61 : vector<16x32xf32>
    %cst_22 = arith.constant dense<0.000000e+00> : vector<16xf32>
    %63 = vector.multi_reduction <add>, %62, %cst_22 [1] : vector<16x32xf32> to vector<16xf32>
    %64 = vector.shape_cast %63 : vector<16xf32> to vector<16x1xf32>
    %cst_23 = arith.constant 3.200000e+01 : f32
    %65 = vector.broadcast %cst_23 : f32 to vector<16x1xf32>
    %66 = arith.divf %64, %65 : vector<16x1xf32>
    %67 = vector.broadcast %59 : vector<16x1xf32> to vector<16x32xf32>
    %68 = arith.subf %53, %67 : vector<16x32xf32>
    %cst_24 = arith.constant 9.99999974E-6 : f32
    %69 = vector.broadcast %cst_24 : f32 to vector<16x1xf32>
    %70 = arith.addf %66, %69 : vector<16x1xf32>
    %71 = math.rsqrt %70 : vector<16x1xf32>
    %72 = vector.broadcast %71 : vector<16x1xf32> to vector<16x32xf32>
    %73 = arith.mulf %68, %72 : vector<16x32xf32>
    %74 = vector.broadcast %54 : vector<1x32xf32> to vector<16x32xf32>
    %75 = arith.mulf %73, %74 : vector<16x32xf32>
    %76 = vector.broadcast %55 : vector<1x32xf32> to vector<16x32xf32>
    %77 = arith.addf %75, %76 : vector<16x32xf32>
    %78 = arith.truncf %77 : vector<16x32xf32> to vector<16x32xbf16>
    %c0_25 = arith.constant 0 : index
    %c0_26 = arith.constant 0 : index
    %79 = vector.load %arg8[%c0_25, %c0_26] : memref<32x64xbf16, #tpu.memory_space<vmem>>, vector<32x64xbf16>
    %cst_27 = arith.constant dense<0.000000e+00> : vector<16x64xf32>
    %80 = tpu.matmul %78, %79, %cst_27 {dimension_numbers = #tpu.dot_dimension_numbers<[1], [0], [0], [1], [0, 0, 1, 1], [], []>} : vector<16x32xbf16>, vector<32x64xbf16>, vector<16x64xf32> -> vector<16x64xf32>
    %c0_28 = arith.constant 0 : index
    %c0_29 = arith.constant 0 : index
    %81 = vector.load %arg9[%c0_28, %c0_29] : memref<1x64xf32, #tpu.memory_space<vmem>>, vector<1x64xf32>
    %82 = vector.broadcast %81 : vector<1x64xf32> to vector<16x64xf32>
    %83 = arith.addf %80, %82 : vector<16x64xf32>
    %cst_30 = arith.constant 5.000000e-01 : f32
    %84 = vector.broadcast %cst_30 : f32 to vector<16x64xf32>
    %85 = arith.mulf %84, %83 : vector<16x64xf32>
    %cst_31 = arith.constant 0.707106769 : f32
    %86 = vector.broadcast %cst_31 : f32 to vector<16x64xf32>
    %87 = arith.mulf %83, %86 : vector<16x64xf32>
    %88 = math.erf %87 : vector<16x64xf32>
    %cst_32 = arith.constant 1.000000e+00 : f32
    %89 = vector.broadcast %cst_32 : f32 to vector<16x64xf32>
    %90 = arith.addf %89, %88 : vector<16x64xf32>
    %91 = arith.mulf %85, %90 : vector<16x64xf32>
    %92 = arith.truncf %91 : vector<16x64xf32> to vector<16x64xbf16>
    %c0_33 = arith.constant 0 : index
    %c0_34 = arith.constant 0 : index
    %93 = vector.load %arg10[%c0_33, %c0_34] : memref<64x32xbf16, #tpu.memory_space<vmem>>, vector<64x32xbf16>
    %cst_35 = arith.constant dense<0.000000e+00> : vector<16x32xf32>
    %94 = tpu.matmul %92, %93, %cst_35 {dimension_numbers = #tpu.dot_dimension_numbers<[1], [0], [0], [1], [0, 0, 1, 1], [], []>} : vector<16x64xbf16>, vector<64x32xbf16>, vector<16x32xf32> -> vector<16x32xf32>
    %c0_36 = arith.constant 0 : index
    %c0_37 = arith.constant 0 : index
    %95 = vector.load %arg11[%c0_36, %c0_37] : memref<1x32xf32, #tpu.memory_space<vmem>>, vector<1x32xf32>
    %96 = vector.broadcast %95 : vector<1x32xf32> to vector<16x32xf32>
    %97 = arith.addf %94, %96 : vector<16x32xf32>
    %98 = arith.addf %77, %97 : vector<16x32xf32>
    %c0_38 = arith.constant 0 : index
    %c0_39 = arith.constant 0 : index
    %99 = vector.load %arg12[%c0_38, %c0_39] : memref<1x32xf32, #tpu.memory_space<vmem>>, vector<1x32xf32>
    %c0_40 = arith.constant 0 : index
    %c0_41 = arith.constant 0 : index
    %100 = vector.load %arg13[%c0_40, %c0_41] : memref<1x32xf32, #tpu.memory_space<vmem>>, vector<1x32xf32>
    %cst_42 = arith.constant dense<0.000000e+00> : vector<16xf32>
    %101 = vector.multi_reduction <add>, %98, %cst_42 [1] : vector<16x32xf32> to vector<16xf32>
    %102 = vector.shape_cast %101 : vector<16xf32> to vector<16x1xf32>
    %cst_43 = arith.constant 3.200000e+01 : f32
    %103 = vector.broadcast %cst_43 : f32 to vector<16x1xf32>
    %104 = arith.divf %102, %103 : vector<16x1xf32>
    %105 = vector.broadcast %104 : vector<16x1xf32> to vector<16x32xf32>
    %106 = arith.subf %98, %105 : vector<16x32xf32>
    %107 = arith.mulf %106, %106 : vector<16x32xf32>
    %cst_44 = arith.constant dense<0.000000e+00> : vector<16xf32>
    %108 = vector.multi_reduction <add>, %107, %cst_44 [1] : vector<16x32xf32> to vector<16xf32>
    %109 = vector.shape_cast %108 : vector<16xf32> to vector<16x1xf32>
    %cst_45 = arith.constant 3.200000e+01 : f32
    %110 = vector.broadcast %cst_45 : f32 to vector<16x1xf32>
    %111 = arith.divf %109, %110 : vector<16x1xf32>
    %112 = vector.broadcast %104 : vector<16x1xf32> to vector<16x32xf32>
    %113 = arith.subf %98, %112 : vector<16x32xf32>
    %cst_46 = arith.constant 9.99999974E-6 : f32
    %114 = vector.broadcast %cst_46 : f32 to vector<16x1xf32>
    %115 = arith.addf %111, %114 : vector<16x1xf32>
    %116 = math.rsqrt %115 : vector<16x1xf32>
    %117 = vector.broadcast %116 : vector<16x1xf32> to vector<16x32xf32>
    %118 = arith.mulf %113, %117 : vector<16x32xf32>
    %119 = vector.broadcast %99 : vector<1x32xf32> to vector<16x32xf32>
    %120 = arith.mulf %118, %119 : vector<16x32xf32>
    %121 = vector.broadcast %100 : vector<1x32xf32> to vector<16x32xf32>
    %122 = arith.addf %120, %121 : vector<16x32xf32>
    %123 = vector.shape_cast %122 : vector<16x32xf32> to vector<2x8x32xf32>
    %124 = tpu.transpose %123, [1, 0, 2] : vector<2x8x32xf32> -> vector<8x2x32xf32>
    %c0_47 = arith.constant 0 : index
    %c0_48 = arith.constant 0 : index
    %c0_49 = arith.constant 0 : index
    %125 = vector.load %arg14[%c0_47, %c0_48, %c0_49] : memref<8x2x32xf32, #tpu.memory_space<vmem>>, vector<8x2x32xf32>
    tpu.vector_store %arg14[%c0_47, %c0_48, %c0_49], %124 {strides = array<i32>} : memref<8x2x32xf32, #tpu.memory_space<vmem>>, vector<8x2x32xf32>,
    return
  }
  func.func @transform_0(%arg0: i32) -> (i32, i32, i32) {
    %c0_i32 = arith.constant 0 : i32
    %c0_i32_0 = arith.constant 0 : i32
    %c0_i32_1 = arith.constant 0 : i32
    return %c0_i32, %arg0, %c0_i32_0 : i32, i32, i32
  }
  func.func @transform_1(%arg0: i32) -> (i32, i32) {
    %c0_i32 = arith.constant 0 : i32
    %c0_i32_0 = arith.constant 0 : i32
    %c0_i32_1 = arith.constant 0 : i32
    return %c0_i32, %c0_i32_0 : i32, i32
  }
  func.func @transform_2(%arg0: i32) -> (i32, i32) {
    %c0_i32 = arith.constant 0 : i32
    %c0_i32_0 = arith.constant 0 : i32
    %c0_i32_1 = arith.constant 0 : i32
    return %c0_i32, %c0_i32_0 : i32, i32
  }
  func.func @transform_3(%arg0: i32) -> (i32, i32) {
    %c0_i32 = arith.constant 0 : i32
    %c0_i32_0 = arith.constant 0 : i32
    %c0_i32_1 = arith.constant 0 : i32
    return %c0_i32, %c0_i32_0 : i32, i32
  }
  func.func @transform_4(%arg0: i32) -> (i32, i32) {
    %c0_i32 = arith.constant 0 : i32
    %c0_i32_0 = arith.constant 0 : i32
    %c0_i32_1 = arith.constant 0 : i32
    return %c0_i32, %c0_i32_0 : i32, i32
  }
  func.func @transform_5(%arg0: i32) -> (i32, i32) {
    %c0_i32 = arith.constant 0 : i32
    %c0_i32_0 = arith.constant 0 : i32
    %c0_i32_1 = arith.constant 0 : i32
    return %c0_i32, %c0_i32_0 : i32, i32
  }
  func.func @transform_6(%arg0: i32) -> (i32, i32) {
    %c0_i32 = arith.constant 0 : i32
    %c0_i32_0 = arith.constant 0 : i32
    %c0_i32_1 = arith.constant 0 : i32
    return %c0_i32, %c0_i32_0 : i32, i32
  }
  func.func @transform_7(%arg0: i32) -> (i32, i32) {
    %c0_i32 = arith.constant 0 : i32
    %c0_i32_0 = arith.constant 0 : i32
    %c0_i32_1 = arith.constant 0 : i32
    return %c0_i32, %c0_i32_0 : i32, i32
  }
  func.func @transform_8(%arg0: i32) -> (i32, i32) {
    %c0_i32 = arith.constant 0 : i32
    %c0_i32_0 = arith.constant 0 : i32
    %c0_i32_1 = arith.constant 0 : i32
    return %c0_i32, %c0_i32_0 : i32, i32
  }
  func.func @transform_9(%arg0: i32) -> (i32, i32) {
    %c0_i32 = arith.constant 0 : i32
    %c0_i32_0 = arith.constant 0 : i32
    %c0_i32_1 = arith.constant 0 : i32
    return %c0_i32, %c0_i32_0 : i32, i32
  }
  func.func @transform_10(%arg0: i32) -> (i32, i32) {
    %c0_i32 = arith.constant 0 : i32
    %c0_i32_0 = arith.constant 0 : i32
    %c0_i32_1 = arith.constant 0 : i32
    return %c0_i32, %c0_i32_0 : i32, i32
  }
  func.func @transform_11(%arg0: i32) -> (i32, i32) {
    %c0_i32 = arith.constant 0 : i32
    %c0_i32_0 = arith.constant 0 : i32
    %c0_i32_1 = arith.constant 0 : i32
    return %c0_i32, %c0_i32_0 : i32, i32
  }
  func.func @transform_12(%arg0: i32) -> (i32, i32) {
    %c0_i32 = arith.constant 0 : i32
    %c0_i32_0 = arith.constant 0 : i32
    %c0_i32_1 = arith.constant 0 : i32
    return %c0_i32, %c0_i32_0 : i32, i32
  }
  func.func @transform_13(%arg0: i32) -> (i32, i32, i32) {
    %c0_i32 = arith.constant 0 : i32
    %c0_i32_0 = arith.constant 0 : i32
    %c0_i32_1 = arith.constant 0 : i32
    return %c0_i32, %arg0, %c0_i32_0 : i32, i32, i32
  }
}

module attributes {stable_mosaic.version = 11 : i64} {
  func.func @kernel(%arg0: i32, %arg1: memref<8x2x32xf32, #tpu.memory_space<vmem>>, %arg2: memref<32x96xbf16, #tpu.memory_space<vmem>>, %arg3: memref<1x96xf32, #tpu.memory_space<vmem>>, %arg4: memref<32x32xbf16, #tpu.memory_space<vmem>>, %arg5: memref<1x32xf32, #tpu.memory_space<vmem>>, %arg6: memref<1x32xf32, #tpu.memory_space<vmem>>, %arg7: memref<1x32xf32, #tpu.memory_space<vmem>>, %arg8: memref<32x64xbf16, #tpu.memory_space<vmem>>, %arg9: memref<1x64xf32, #tpu.memory_space<vmem>>, %arg10: memref<64x32xbf16, #tpu.memory_space<vmem>>, %arg11: memref<1x32xf32, #tpu.memory_space<vmem>>, %arg12: memref<1x32xf32, #tpu.memory_space<vmem>>, %arg13: memref<1x32xf32, #tpu.memory_space<vmem>>, %arg14: memref<8x2x32xf32, #tpu.memory_space<vmem>>) attributes {dimension_semantics = [#tpu.dimension_semantics<parallel>], iteration_bounds = array<i64: 1>, scalar_prefetch = 0 : i64, scratch_operands = 0 : i64, tpu.core_type = #tpu.core_type<tc>, window_params = [{transform_indices = @transform_0, window_bounds = array<i64: 8, 2, 32>}, {pipeline_mode = #tpu.pipeline_mode<synchronous>, transform_indices = @transform_1, window_bounds = array<i64: 32, 96>}, {pipeline_mode = #tpu.pipeline_mode<synchronous>, transform_indices = @transform_2, window_bounds = array<i64: 1, 96>}, {pipeline_mode = #tpu.pipeline_mode<synchronous>, transform_indices = @transform_3, window_bounds = array<i64: 32, 32>}, {pipeline_mode = #tpu.pipeline_mode<synchronous>, transform_indices = @transform_4, window_bounds = array<i64: 1, 32>}, {pipeline_mode = #tpu.pipeline_mode<synchronous>, transform_indices = @transform_5, window_bounds = array<i64: 1, 32>}, {pipeline_mode = #tpu.pipeline_mode<synchronous>, transform_indices = @transform_6, window_bounds = array<i64: 1, 32>}, {pipeline_mode = #tpu.pipeline_mode<synchronous>, transform_indices = @transform_7, window_bounds = array<i64: 32, 64>}, {pipeline_mode = #tpu.pipeline_mode<synchronous>, transform_indices = @transform_8, window_bounds = array<i64: 1, 64>}, {pipeline_mode = #tpu.pipeline_mode<synchronous>, transform_indices = @transform_9, window_bounds = array<i64: 64, 32>}, {pipeline_mode = #tpu.pipeline_mode<synchronous>, transform_indices = @transform_10, window_bounds = array<i64: 1, 32>}, {pipeline_mode = #tpu.pipeline_mode<synchronous>, transform_indices = @transform_11, window_bounds = array<i64: 1, 32>}, {pipeline_mode = #tpu.pipeline_mode<synchronous>, transform_indices = @transform_12, window_bounds = array<i64: 1, 32>}, {transform_indices = @transform_13, window_bounds = array<i64: 8, 2, 32>}]} {
    %c0 = arith.constant 0 : index
    %c0_0 = arith.constant 0 : index
    %c0_1 = arith.constant 0 : index
    %0 = vector.load %arg1[%c0, %c0_0, %c0_1] : memref<8x2x32xf32, #tpu.memory_space<vmem>>, vector<8x2x32xf32>
    %1 = tpu.transpose %0, [1, 0, 2] : vector<8x2x32xf32> -> vector<2x8x32xf32>
    %2 = vector.shape_cast %1 : vector<2x8x32xf32> to vector<16x32xf32>
    %3 = arith.truncf %2 : vector<16x32xf32> to vector<16x32xbf16>
    %c0_2 = arith.constant 0 : index
    %c0_3 = arith.constant 0 : index
    %4 = vector.load %arg2[%c0_2, %c0_3] : memref<32x96xbf16, #tpu.memory_space<vmem>>, vector<32x96xbf16>
    %cst = arith.constant dense<0.000000e+00> : vector<16x96xf32>
    %5 = tpu.matmul %3, %4, %cst {dimension_numbers = #tpu.dot_dimension_numbers<[1], [0], [0], [1], [0, 0, 1, 1], [], []>} : vector<16x32xbf16>, vector<32x96xbf16>, vector<16x96xf32> -> vector<16x96xf32>
    %c0_4 = arith.constant 0 : index
    %c0_5 = arith.constant 0 : index
    %6 = vector.load %arg3[%c0_4, %c0_5] : memref<1x96xf32, #tpu.memory_space<vmem>>, vector<1x96xf32>
    %7 = vector.broadcast %6 : vector<1x96xf32> to vector<16x96xf32>
    %8 = arith.addf %5, %7 : vector<16x96xf32>
    %9 = arith.truncf %8 : vector<16x96xf32> to vector<16x96xbf16>
    %10 = vector.shape_cast %9 : vector<16x96xbf16> to vector<2x8x96xbf16>
    %11 = vector.extract_strided_slice %10 {offsets = [0, 0, 0], sizes = [2, 8, 8], strides = [1, 1, 1]} : vector<2x8x96xbf16> to vector<2x8x8xbf16>
    %12 = vector.extract_strided_slice %10 {offsets = [0, 0, 8], sizes = [2, 8, 8], strides = [1, 1, 1]} : vector<2x8x96xbf16> to vector<2x8x8xbf16>
    %13 = vector.extract_strided_slice %10 {offsets = [0, 0, 16], sizes = [2, 8, 8], strides = [1, 1, 1]} : vector<2x8x96xbf16> to vector<2x8x8xbf16>
    %14 = vector.extract_strided_slice %10 {offsets = [0, 0, 24], sizes = [2, 8, 8], strides = [1, 1, 1]} : vector<2x8x96xbf16> to vector<2x8x8xbf16>
    %15 = tpu.concatenate %11, %12, %13, %14 in 0 : vector<2x8x8xbf16>, vector<2x8x8xbf16>, vector<2x8x8xbf16>, vector<2x8x8xbf16> -> vector<8x8x8xbf16>
    %16 = vector.extract_strided_slice %10 {offsets = [0, 0, 32], sizes = [2, 8, 8], strides = [1, 1, 1]} : vector<2x8x96xbf16> to vector<2x8x8xbf16>
    %17 = vector.extract_strided_slice %10 {offsets = [0, 0, 40], sizes = [2, 8, 8], strides = [1, 1, 1]} : vector<2x8x96xbf16> to vector<2x8x8xbf16>
    %18 = vector.extract_strided_slice %10 {offsets = [0, 0, 48], sizes = [2, 8, 8], strides = [1, 1, 1]} : vector<2x8x96xbf16> to vector<2x8x8xbf16>
    %19 = vector.extract_strided_slice %10 {offsets = [0, 0, 56], sizes = [2, 8, 8], strides = [1, 1, 1]} : vector<2x8x96xbf16> to vector<2x8x8xbf16>
    %20 = tpu.concatenate %16, %17, %18, %19 in 0 : vector<2x8x8xbf16>, vector<2x8x8xbf16>, vector<2x8x8xbf16>, vector<2x8x8xbf16> -> vector<8x8x8xbf16>
    %21 = vector.extract_strided_slice %10 {offsets = [0, 0, 64], sizes = [2, 8, 8], strides = [1, 1, 1]} : vector<2x8x96xbf16> to vector<2x8x8xbf16>
    %22 = vector.extract_strided_slice %10 {offsets = [0, 0, 72], sizes = [2, 8, 8], strides = [1, 1, 1]} : vector<2x8x96xbf16> to vector<2x8x8xbf16>
    %23 = vector.extract_strided_slice %10 {offsets = [0, 0, 80], sizes = [2, 8, 8], strides = [1, 1, 1]} : vector<2x8x96xbf16> to vector<2x8x8xbf16>
    %24 = vector.extract_strided_slice %10 {offsets = [0, 0, 88], sizes = [2, 8, 8], strides = [1, 1, 1]} : vector<2x8x96xbf16> to vector<2x8x8xbf16>
    %25 = tpu.concatenate %21, %22, %23, %24 in 0 : vector<2x8x8xbf16>, vector<2x8x8xbf16>, vector<2x8x8xbf16>, vector<2x8x8xbf16> -> vector<8x8x8xbf16>
    %cst_6 = arith.constant dense<0.000000e+00> : vector<8x8x8xf32>
    %26 = tpu.matmul %15, %20, %cst_6 {dimension_numbers = #tpu.dot_dimension_numbers<[2], [2], [1], [1], [0, 0, 0, 1, 1, 1], [0], [0]>} : vector<8x8x8xbf16>, vector<8x8x8xbf16>, vector<8x8x8xf32> -> vector<8x8x8xf32>
    %cst_7 = arith.constant 0.353553385 : f32
    %27 = vector.broadcast %cst_7 : f32 to vector<8x8x8xf32>
    %28 = arith.mulf %26, %27 : vector<8x8x8xf32>
    %cst_8 = arith.constant dense<0xFF800000> : vector<8x8xf32>
    %29 = vector.multi_reduction <maximumf>, %28, %cst_8 [2] : vector<8x8x8xf32> to vector<8x8xf32>
    %30 = vector.shape_cast %29 : vector<8x8xf32> to vector<8x8x1xf32>
    %31 = vector.broadcast %30 : vector<8x8x1xf32> to vector<8x8x8xf32>
    %32 = arith.subf %28, %31 : vector<8x8x8xf32>
    %33 = math.exp %32 : vector<8x8x8xf32>
    %cst_9 = arith.constant dense<0.000000e+00> : vector<8x8xf32>
    %34 = vector.multi_reduction <add>, %33, %cst_9 [2] : vector<8x8x8xf32> to vector<8x8xf32>
    %35 = vector.shape_cast %34 : vector<8x8xf32> to vector<8x8x1xf32>
    %36 = tpu.reciprocal %35 {approx = true} : vector<8x8x1xf32> -> vector<8x8x1xf32>
    %37 = vector.broadcast %36 : vector<8x8x1xf32> to vector<8x8x8xf32>
    %38 = arith.mulf %33, %37 : vector<8x8x8xf32>
    %39 = arith.truncf %38 : vector<8x8x8xf32> to vector<8x8x8xbf16>
    %cst_10 = arith.constant dense<0.000000e+00> : vector<8x8x8xf32>
    %40 = tpu.matmul %39, %25, %cst_10 {dimension_numbers = #tpu.dot_dimension_numbers<[2], [1], [1], [2], [0, 0, 0, 1, 1, 2], [0], [0]>} : vector<8x8x8xbf16>, vector<8x8x8xbf16>, vector<8x8x8xf32> -> vector<8x8x8xf32>
    %41 = vector.extract_strided_slice %40 {offsets = [0, 0, 0], sizes = [2, 8, 8], strides = [1, 1, 1]} : vector<8x8x8xf32> to vector<2x8x8xf32>
    %42 = vector.extract_strided_slice %40 {offsets = [2, 0, 0], sizes = [2, 8, 8], strides = [1, 1, 1]} : vector<8x8x8xf32> to vector<2x8x8xf32>
    %43 = vector.extract_strided_slice %40 {offsets = [4, 0, 0], sizes = [2, 8, 8], strides = [1, 1, 1]} : vector<8x8x8xf32> to vector<2x8x8xf32>
    %44 = vector.extract_strided_slice %40 {offsets = [6, 0, 0], sizes = [2, 8, 8], strides = [1, 1, 1]} : vector<8x8x8xf32> to vector<2x8x8xf32>
    %45 = tpu.concatenate %41, %42, %43, %44 in 2 : vector<2x8x8xf32>, vector<2x8x8xf32>, vector<2x8x8xf32>, vector<2x8x8xf32> -> vector<2x8x32xf32>
    %46 = vector.shape_cast %45 : vector<2x8x32xf32> to vector<16x32xf32>
    %47 = arith.truncf %46 : vector<16x32xf32> to vector<16x32xbf16>
    %c0_11 = arith.constant 0 : index
    %c0_12 = arith.constant 0 : index
    %48 = vector.load %arg4[%c0_11, %c0_12] : memref<32x32xbf16, #tpu.memory_space<vmem>>, vector<32x32xbf16>
    %cst_13 = arith.constant dense<0.000000e+00> : vector<16x32xf32>
    %49 = tpu.matmul %47, %48, %cst_13 {dimension_numbers = #tpu.dot_dimension_numbers<[1], [0], [0], [1], [0, 0, 1, 1], [], []>} : vector<16x32xbf16>, vector<32x32xbf16>, vector<16x32xf32> -> vector<16x32xf32>
    %c0_14 = arith.constant 0 : index
    %c0_15 = arith.constant 0 : index
    %50 = vector.load %arg5[%c0_14, %c0_15] : memref<1x32xf32, #tpu.memory_space<vmem>>, vector<1x32xf32>
    %51 = vector.broadcast %50 : vector<1x32xf32> to vector<16x32xf32>
    %52 = arith.addf %49, %51 : vector<16x32xf32>
    %53 = arith.addf %2, %52 : vector<16x32xf32>
    %c0_16 = arith.constant 0 : index
    %c0_17 = arith.constant 0 : index
    %54 = vector.load %arg6[%c0_16, %c0_17] : memref<1x32xf32, #tpu.memory_space<vmem>>, vector<1x32xf32>
    %c0_18 = arith.constant 0 : index
    %c0_19 = arith.constant 0 : index
    %55 = vector.load %arg7[%c0_18, %c0_19] : memref<1x32xf32, #tpu.memory_space<vmem>>, vector<1x32xf32>
    %cst_20 = arith.constant dense<0.000000e+00> : vector<16xf32>
    %56 = vector.multi_reduction <add>, %53, %cst_20 [1] : vector<16x32xf32> to vector<16xf32>
    %57 = vector.shape_cast %56 : vector<16xf32> to vector<16x1xf32>
    %cst_21 = arith.constant 3.200000e+01 : f32
    %58 = vector.broadcast %cst_21 : f32 to vector<16x1xf32>
    %59 = arith.divf %57, %58 : vector<16x1xf32>
    %60 = vector.broadcast %59 : vector<16x1xf32> to vector<16x32xf32>
    %61 = arith.subf %53, %60 : vector<16x32xf32>
    %62 = arith.mulf %61, %61 : vector<16x32xf32>
    %cst_22 = arith.constant dense<0.000000e+00> : vector<16xf32>
    %63 = vector.multi_reduction <add>, %62, %cst_22 [1] : vector<16x32xf32> to vector<16xf32>
    %64 = vector.shape_cast %63 : vector<16xf32> to vector<16x1xf32>
    %cst_23 = arith.constant 3.200000e+01 : f32
    %65 = vector.broadcast %cst_23 : f32 to vector<16x1xf32>
    %66 = arith.divf %64, %65 : vector<16x1xf32>
    %67 = vector.broadcast %59 : vector<16x1xf32> to vector<16x32xf32>
    %68 = arith.subf %53, %67 : vector<16x32xf32>
    %cst_24 = arith.constant 9.99999974E-6 : f32
    %69 = vector.broadcast %cst_24 : f32 to vector<16x1xf32>
    %70 = arith.addf %66, %69 : vector<16x1xf32>
    %71 = math.rsqrt %70 : vector<16x1xf32>
    %72 = vector.broadcast %71 : vector<16x1xf32> to vector<16x32xf32>
    %73 = arith.mulf %68, %72 : vector<16x32xf32>
    %74 = vector.broadcast %54 : vector<1x32xf32> to vector<16x32xf32>
    %75 = arith.mulf %73, %74 : vector<16x32xf32>
    %76 = vector.broadcast %55 : vector<1x32xf32> to vector<16x32xf32>
    %77 = arith.addf %75, %76 : vector<16x32xf32>
    %78 = arith.truncf %77 : vector<16x32xf32> to vector<16x32xbf16>
    %c0_25 = arith.constant 0 : index
    %c0_26 = arith.constant 0 : index
    %79 = vector.load %arg8[%c0_25, %c0_26] : memref<32x64xbf16, #tpu.memory_space<vmem>>, vector<32x64xbf16>
    %cst_27 = arith.constant dense<0.000000e+00> : vector<16x64xf32>
    %80 = tpu.matmul %78, %79, %cst_27 {dimension_numbers = #tpu.dot_dimension_numbers<[1], [0], [0], [1], [0, 0, 1, 1], [], []>} : vector<16x32xbf16>, vector<32x64xbf16>, vector<16x64xf32> -> vector<16x64xf32>
    %c0_28 = arith.constant 0 : index
    %c0_29 = arith.constant 0 : index
    %81 = vector.load %arg9[%c0_28, %c0_29] : memref<1x64xf32, #tpu.memory_space<vmem>>, vector<1x64xf32>
    %82 = vector.broadcast %81 : vector<1x64xf32> to vector<16x64xf32>
    %83 = arith.addf %80, %82 : vector<16x64xf32>
    %cst_30 = arith.constant 5.000000e-01 : f32
    %84 = vector.broadcast %cst_30 : f32 to vector<16x64xf32>
    %85 = arith.mulf %84, %83 : vector<16x64xf32>
    %cst_31 = arith.constant 0.707106769 : f32
    %86 = vector.broadcast %cst_31 : f32 to vector<16x64xf32>
    %87 = arith.mulf %83, %86 : vector<16x64xf32>
    %88 = math.erf %87 : vector<16x64xf32>
    %cst_32 = arith.constant 1.000000e+00 : f32
    %89 = vector.broadcast %cst_32 : f32 to vector<16x64xf32>
    %90 = arith.addf %89, %88 : vector<16x64xf32>
    %91 = arith.mulf %85, %90 : vector<16x64xf32>
    %92 = arith.truncf %91 : vector<16x64xf32> to vector<16x64xbf16>
    %c0_33 = arith.constant 0 : index
    %c0_34 = arith.constant 0 : index
    %93 = vector.load %arg10[%c0_33, %c0_34] : memref<64x32xbf16, #tpu.memory_space<vmem>>, vector<64x32xbf16>
    %cst_35 = arith.constant dense<0.000000e+00> : vector<16x32xf32>
    %94 = tpu.matmul %92, %93, %cst_35 {dimension_numbers = #tpu.dot_dimension_numbers<[1], [0], [0], [1], [0, 0, 1, 1], [], []>} : vector<16x64xbf16>, vector<64x32xbf16>, vector<16x32xf32> -> vector<16x32xf32>
    %c0_36 = arith.constant 0 : index
    %c0_37 = arith.constant 0 : index
    %95 = vector.load %arg11[%c0_36, %c0_37] : memref<1x32xf32, #tpu.memory_space<vmem>>, vector<1x32xf32>
    %96 = vector.broadcast %95 : vector<1x32xf32> to vector<16x32xf32>
    %97 = arith.addf %94, %96 : vector<16x32xf32>
    %98 = arith.addf %77, %97 : vector<16x32xf32>
    %c0_38 = arith.constant 0 : index
    %c0_39 = arith.constant 0 : index
    %99 = vector.load %arg12[%c0_38, %c0_39] : memref<1x32xf32, #tpu.memory_space<vmem>>, vector<1x32xf32>
    %c0_40 = arith.constant 0 : index
    %c0_41 = arith.constant 0 : index
    %100 = vector.load %arg13[%c0_40, %c0_41] : memref<1x32xf32, #tpu.memory_space<vmem>>, vector<1x32xf32>
    %cst_42 = arith.constant dense<0.000000e+00> : vector<16xf32>
    %101 = vector.multi_reduction <add>, %98, %cst_42 [1] : vector<16x32xf32> to vector<16xf32>
    %102 = vector.shape_cast %101 : vector<16xf32> to vector<16x1xf32>
    %cst_43 = arith.constant 3.200000e+01 : f32
    %103 = vector.broadcast %cst_43 : f32 to vector<16x1xf32>
    %104 = arith.divf %102, %103 : vector<16x1xf32>
    %105 = vector.broadcast %104 : vector<16x1xf32> to vector<16x32xf32>
    %106 = arith.subf %98, %105 : vector<16x32xf32>
    %107 = arith.mulf %106, %106 : vector<16x32xf32>
    %cst_44 = arith.constant dense<0.000000e+00> : vector<16xf32>
    %108 = vector.multi_reduction <add>, %107, %cst_44 [1] : vector<16x32xf32> to vector<16xf32>
    %109 = vector.shape_cast %108 : vector<16xf32> to vector<16x1xf32>
    %cst_45 = arith.constant 3.200000e+01 : f32
    %110 = vector.broadcast %cst_45 : f32 to vector<16x1xf32>
    %111 = arith.divf %109, %110 : vector<16x1xf32>
    %112 = vector.broadcast %104 : vector<16x1xf32> to vector<16x32xf32>
    %113 = arith.subf %98, %112 : vector<16x32xf32>
    %cst_46 = arith.constant 9.99999974E-6 : f32
    %114 = vector.broadcast %cst_46 : f32 to vector<16x1xf32>
    %115 = arith.addf %111, %114 : vector<16x1xf32>
    %116 = math.rsqrt %115 : vector<16x1xf32>
    %117 = vector.broadcast %116 : vector<16x1xf32> to vector<16x32xf32>
    %118 = arith.mulf %113, %117 : vector<16x32xf32>
    %119 = vector.broadcast %99 : vector<1x32xf32> to vector<16x32xf32>
    %120 = arith.mulf %118, %119 : vector<16x32xf32>
    %121 = vector.broadcast %100 : vector<1x32xf32> to vector<16x32xf32>
    %122 = arith.addf %120, %121 : vector<16x32xf32>
    %123 = vector.shape_cast %122 : vector<16x32xf32> to vector<2x8x32xf32>
    %124 = tpu.transpose %123, [1, 0, 2] : vector<2x8x32xf32> -> vector<8x2x32xf32>
    %c0_47 = arith.constant 0 : index
    %c0_48 = arith.constant 0 : index
    %c0_49 = arith.constant 0 : index
    %125 = vector.load %arg14[%c0_47, %c0_48, %c0_49] : memref<8x2x32xf32, #tpu.memory_space<vmem>>, vector<8x2x32xf32>
    tpu.vector_store %arg14[%c0_47, %c0_48, %c0_49], %124 {strides = array<i32>} : memref<8x2x32xf32, #tpu.memory_space<vmem>>, vector<8x2x32xf32>,
    return
  }
  func.func @transform_0(%arg0: i32) -> (i32, i32, i32) {
    %c0_i32 = arith.constant 0 : i32
    %c0_i32_0 = arith.constant 0 : i32
    %c0_i32_1 = arith.constant 0 : i32
    return %c0_i32, %arg0, %c0_i32_0 : i32, i32, i32
  }
  func.func @transform_1(%arg0: i32) -> (i32, i32) {
    %c0_i32 = arith.constant 0 : i32
    %c0_i32_0 = arith.constant 0 : i32
    %c0_i32_1 = arith.constant 0 : i32
    return %c0_i32, %c0_i32_0 : i32, i32
  }
  func.func @transform_2(%arg0: i32) -> (i32, i32) {
    %c0_i32 = arith.constant 0 : i32
    %c0_i32_0 = arith.constant 0 : i32
    %c0_i32_1 = arith.constant 0 : i32
    return %c0_i32, %c0_i32_0 : i32, i32
  }
  func.func @transform_3(%arg0: i32) -> (i32, i32) {
    %c0_i32 = arith.constant 0 : i32
    %c0_i32_0 = arith.constant 0 : i32
    %c0_i32_1 = arith.constant 0 : i32
    return %c0_i32, %c0_i32_0 : i32, i32
  }
  func.func @transform_4(%arg0: i32) -> (i32, i32) {
    %c0_i32 = arith.constant 0 : i32
    %c0_i32_0 = arith.constant 0 : i32
    %c0_i32_1 = arith.constant 0 : i32
    return %c0_i32, %c0_i32_0 : i32, i32
  }
  func.func @transform_5(%arg0: i32) -> (i32, i32) {
    %c0_i32 = arith.constant 0 : i32
    %c0_i32_0 = arith.constant 0 : i32
    %c0_i32_1 = arith.constant 0 : i32
    return %c0_i32, %c0_i32_0 : i32, i32
  }
  func.func @transform_6(%arg0: i32) -> (i32, i32) {
    %c0_i32 = arith.constant 0 : i32
    %c0_i32_0 = arith.constant 0 : i32
    %c0_i32_1 = arith.constant 0 : i32
    return %c0_i32, %c0_i32_0 : i32, i32
  }
  func.func @transform_7(%arg0: i32) -> (i32, i32) {
    %c0_i32 = arith.constant 0 : i32
    %c0_i32_0 = arith.constant 0 : i32
    %c0_i32_1 = arith.constant 0 : i32
    return %c0_i32, %c0_i32_0 : i32, i32
  }
  func.func @transform_8(%arg0: i32) -> (i32, i32) {
    %c0_i32 = arith.constant 0 : i32
    %c0_i32_0 = arith.constant 0 : i32
    %c0_i32_1 = arith.constant 0 : i32
    return %c0_i32, %c0_i32_0 : i32, i32
  }
  func.func @transform_9(%arg0: i32) -> (i32, i32) {
    %c0_i32 = arith.constant 0 : i32
    %c0_i32_0 = arith.constant 0 : i32
    %c0_i32_1 = arith.constant 0 : i32
    return %c0_i32, %c0_i32_0 : i32, i32
  }
  func.func @transform_10(%arg0: i32) -> (i32, i32) {
    %c0_i32 = arith.constant 0 : i32
    %c0_i32_0 = arith.constant 0 : i32
    %c0_i32_1 = arith.constant 0 : i32
    return %c0_i32, %c0_i32_0 : i32, i32
  }
  func.func @transform_11(%arg0: i32) -> (i32, i32) {
    %c0_i32 = arith.constant 0 : i32
    %c0_i32_0 = arith.constant 0 : i32
    %c0_i32_1 = arith.constant 0 : i32
    return %c0_i32, %c0_i32_0 : i32, i32
  }
  func.func @transform_12(%arg0: i32) -> (i32, i32) {
    %c0_i32 = arith.constant 0 : i32
    %c0_i32_0 = arith.constant 0 : i32
    %c0_i32_1 = arith.constant 0 : i32
    return %c0_i32, %c0_i32_0 : i32, i32
  }
  func.func @transform_13(%arg0: i32) -> (i32, i32, i32) {
    %c0_i32 = arith.constant 0 : i32
    %c0_i32_0 = arith.constant 0 : i32
    %c0_i32_1 = arith.constant 0 : i32
    return %c0_i32, %arg0, %c0_i32_0 : i32, i32, i32
  }
}

</mosaic_0001>

<llo_original>
// kernel: tpu_custom_call.1
$region0: #{tpu_custom_call.1}
  #allocation0 [shape = 'u32[]', space=smem, size = 0x4, offset = 0x4, fixed_abs, tag = 'smem constant byte address 0x4 - core index']
  #allocation1 [shape = 'u32[72,128]{1,0:T(1,128)}', space=vmem, size = 0x9000, scoped, tag = 'internal scratch']
  %s0 = inlined_call_operand.vmem [shape: f32[8,2,32], index: 0, kind: input, shape index: {}]
  %s1 = inlined_call_operand.vmem [shape: bf16[32,96], index: 1, kind: input, shape index: {}]
  %s2 = inlined_call_operand.vmem [shape: f32[1,96], index: 2, kind: input, shape index: {}]
  %s3 = inlined_call_operand.vmem [shape: bf16[32,32], index: 3, kind: input, shape index: {}]
  %s4 = inlined_call_operand.vmem [shape: f32[1,32], index: 4, kind: input, shape index: {}]
  %s5 = inlined_call_operand.vmem [shape: f32[1,32], index: 5, kind: input, shape index: {}]
  %s6 = inlined_call_operand.vmem [shape: f32[1,32], index: 6, kind: input, shape index: {}]
  %s7 = inlined_call_operand.hbm [shape: bf16[32,64], index: 7, kind: input, shape index: {}]
  %s8 = inlined_call_operand.vmem [shape: f32[1,64], index: 8, kind: input, shape index: {}]
  %s9 = inlined_call_operand.vmem [shape: bf16[64,32], index: 9, kind: input, shape index: {}]
  %s10 = inlined_call_operand.vmem [shape: f32[1,32], index: 10, kind: input, shape index: {}]
  %s11 = inlined_call_operand.vmem [shape: f32[1,32], index: 11, kind: input, shape index: {}]
  %s12 = inlined_call_operand.vmem [shape: f32[1,32], index: 12, kind: input, shape index: {}]
  %s13 = inlined_call_operand.hbm [shape: f32[8,2,32], index: 13, kind: output, shape index: {}]
  %s14 = sld [smem:[#allocation0]]
  $region66: #{tpu_custom_call.1} parent=0
    _
  %s16 = ssub.s32 1, %s14
  %s17 = scalar_select 0, %s16, %s14
  $region1: #{tpu_custom_call.1} parent=0
    #allocation2 [shape = 'u8[8192]{0}', space=vmem, size = 0x2000, scoped, tag = 'input window, operand 7, single buffered']
    #allocation3 [shape = 's32[1]{0}', space=sflag, size = 0x4, scoped, tag = 'scoped memory for tpu_custom_call.1']
    #allocation4 [shape = 's32[1]{0}', space=sflag, size = 0x4, scoped, tag = 'scoped memory for tpu_custom_call.1']
    #allocation5 [shape = 'u8[8192]{0}', space=vmem, size = 0x2000, scoped, tag = 'output window, operand 0, single buffered']
    %18 = vsyncpa [#allocation3], 0
    %19 = vsyncpa [#allocation4], 0
    // Predicated region
    $region2: #{tpu_custom_call.1} parent=1 // pred_check
      _
    $region3: #{tpu_custom_call.1} parent=1 // pred_check_branch
      %21 = sbr.rel (0) target = $region5
    $region4: #{tpu_custom_call.1} parent=1 // pred_region
      _
    $region5: #{tpu_custom_call.1} parent=1 // pred_fallthru
      _
    // Predicated region
    $region6: #{tpu_custom_call.1} parent=1 // pred_check
      _
    $region7: #{tpu_custom_call.1} parent=1 // pred_check_branch
      %23 = sbr.rel (0) target = $region9
    $region8: #{tpu_custom_call.1} parent=1 // pred_region
      _
    $region9: #{tpu_custom_call.1} parent=1 // pred_fallthru
      _
    // Predicated region
    $region10: #{tpu_custom_call.1} parent=1 // pred_check
      _
    $region11: #{tpu_custom_call.1} parent=1 // pred_check_branch
      %25 = sbr.rel (0) target = $region13
    $region12: #{tpu_custom_call.1} parent=1 // pred_region
      _
    $region13: #{tpu_custom_call.1} parent=1 // pred_fallthru
      _
    // Predicated region
    $region14: #{tpu_custom_call.1} parent=1 // pred_check
      _
    $region15: #{tpu_custom_call.1} parent=1 // pred_check_branch
      %27 = sbr.rel (0) target = $region17
    $region16: #{tpu_custom_call.1} parent=1 // pred_region
      _
    $region17: #{tpu_custom_call.1} parent=1 // pred_fallthru
      _
    // Predicated region
    $region18: #{tpu_custom_call.1} parent=1 // pred_check
      _
    $region19: #{tpu_custom_call.1} parent=1 // pred_check_branch
      %29 = sbr.rel (0) target = $region21
    $region20: #{tpu_custom_call.1} parent=1 // pred_region
      _
    $region21: #{tpu_custom_call.1} parent=1 // pred_fallthru
      _
    // Predicated region
    $region22: #{tpu_custom_call.1} parent=1 // pred_check
      _
    $region23: #{tpu_custom_call.1} parent=1 // pred_check_branch
      %31 = sbr.rel (0) target = $region25
    $region24: #{tpu_custom_call.1} parent=1 // pred_region
      _
    $region25: #{tpu_custom_call.1} parent=1 // pred_fallthru
      _
    // Predicated region
    $region26: #{tpu_custom_call.1} parent=1 // pred_check
      _
    $region27: #{tpu_custom_call.1} parent=1 // pred_check_branch
      %33 = sbr.rel (0) target = $region29
    $region28: #{tpu_custom_call.1} parent=1 // pred_region
      _
    $region29: #{tpu_custom_call.1} parent=1 // pred_fallthru
      _
    // Predicated region
    $region30: #{tpu_custom_call.1} parent=1 // pred_check
      _
    $region31: #{tpu_custom_call.1} parent=1 // pred_check_branch
      %35 = sbr.rel (0) target = $region33
    $region32: #{tpu_custom_call.1} parent=1 // pred_region
      %37 = vsyncadd [#allocation3], 0
      %s38 = sshll.u32 %s7, 4
      %s39 = int_to_ptr.hbm [resolvable:$true] %s38
      %s40 = sshll.u32 [#allocation2], 4
      %s41 = int_to_ptr.vmem [resolvable:$true] %s40
      %46 = dma.hbm_to_vmem [thread:$0]  %s39, 256, %s41, [#allocation3], 64, 64, 4
    $region33: #{tpu_custom_call.1} parent=1 // pred_fallthru
      _
    // Predicated region
    $region34: #{tpu_custom_call.1} parent=1 // pred_check
      _
    $region35: #{tpu_custom_call.1} parent=1 // pred_check_branch
      %48 = sbr.rel (0) target = $region37
    $region36: #{tpu_custom_call.1} parent=1 // pred_region
      _
    $region37: #{tpu_custom_call.1} parent=1 // pred_fallthru
      _
    // Predicated region
    $region38: #{tpu_custom_call.1} parent=1 // pred_check
      _
    $region39: #{tpu_custom_call.1} parent=1 // pred_check_branch
      %50 = sbr.rel (0) target = $region41
    $region40: #{tpu_custom_call.1} parent=1 // pred_region
      _
    $region41: #{tpu_custom_call.1} parent=1 // pred_fallthru
      _
    // Predicated region
    $region42: #{tpu_custom_call.1} parent=1 // pred_check
      _
    $region43: #{tpu_custom_call.1} parent=1 // pred_check_branch
      %52 = sbr.rel (0) target = $region45
    $region44: #{tpu_custom_call.1} parent=1 // pred_region
      _
    $region45: #{tpu_custom_call.1} parent=1 // pred_fallthru
      _
    // Predicated region
    $region46: #{tpu_custom_call.1} parent=1 // pred_check
      _
    $region47: #{tpu_custom_call.1} parent=1 // pred_check_branch
      %54 = sbr.rel (0) target = $region49
    $region48: #{tpu_custom_call.1} parent=1 // pred_region
      _
    $region49: #{tpu_custom_call.1} parent=1 // pred_fallthru
      _
    // Predicated region
    $region50: #{tpu_custom_call.1} parent=1 // pred_check
      _
    $region51: #{tpu_custom_call.1} parent=1 // pred_check_branch
      %56 = sbr.rel (0) target = $region53
    $region52: #{tpu_custom_call.1} parent=1 // pred_region
      _
    $region53: #{tpu_custom_call.1} parent=1 // pred_fallthru
      _
    // Predicated region
    $region54: #{tpu_custom_call.1} parent=1 // pred_check
      _
    $region55: #{tpu_custom_call.1} parent=1 // pred_check_branch
      %58 = sbr.rel (0) target = $region57
    $region56: #{tpu_custom_call.1} parent=1 // pred_region
      %60 = dma.done [#allocation3], 256
    $region57: #{tpu_custom_call.1} parent=1 // pred_fallthru
      _
    %v62 = vld [vmem:[%s0] sm:$0x3]
    %v63 = vld [vmem:[%s0 + $0x2] sm:$0x3]
    %v64 = vld [vmem:[%s0 + $0x4] sm:$0x3]
    %v65 = vld [vmem:[%s0 + $0x6] sm:$0x3]
    %v66 = vld [vmem:[%s0 + $0x8] sm:$0x3]
    %v67 = vld [vmem:[%s0 + $0xa] sm:$0x3]
    %v68 = vld [vmem:[%s0 + $0xc] sm:$0x3]
    %v69 = vld [vmem:[%s0 + $0xe] sm:$0x3]
    %v70 = vrot.slane %v64, 4
    %vm71 = vcmask 1047556
    %v72 = vsel %vm71, %v70, %v62
    %v74 = vunpack.c.l.s4 1983009808
    %v75 = vunpack.c.0.s8 %v74
    %v76 = vperm.slane %v72, %v75
    %v77 = vrot.slane %v65, 4
    %v78 = vsel %vm71, %v77, %v63
    %v80 = vunpack.c.l.s4 1983009808
    %v81 = vunpack.c.0.s8 %v80
    %v82 = vperm.slane %v78, %v81
    %v83 = vrot.slane %v68, 4
    %v84 = vsel %vm71, %v83, %v66
    %v86 = vunpack.c.l.s4 1983009808
    %v87 = vunpack.c.0.s8 %v86
    %v88 = vperm.slane %v84, %v87
    %v89 = vrot.slane %v69, 4
    %v90 = vsel %vm71, %v89, %v67
    %v92 = vunpack.c.l.s4 1983009808
    %v93 = vunpack.c.0.s8 %v92
    %v94 = vperm.slane %v90, %v93
    %v95 = vrot.slane %v82, 4
    %v96 = vsel %vm71, %v95, %v76
    %v98 = vunpack.c.l.s4 1934713408
    %v99 = vunpack.c.0.s8 %v98
    %v100 = vperm.slane %v96, %v99
    %v101 = vrot.slane %v94, 4
    %v102 = vsel %vm71, %v101, %v88
    %v104 = vunpack.c.l.s4 1934713408
    %v105 = vunpack.c.0.s8 %v104
    %v106 = vperm.slane %v102, %v105
    %v107 = vrot.slane %v106, 4
    %v108 = vsel %vm71, %v107, %v100
    %v109 = vrot.slane %v100, 4
    %v110 = vsel %vm71, %v106, %v109
    %v111 = vpack.c.bf16 %v110, %v108
    %v112 = vld [vmem:[%s1] sm:$0xf]
    %v113 = vld [vmem:[%s1 + $0x4] sm:$0xf]
    %v114 = vld [vmem:[%s1 + $0x8] sm:$0xf]
    %v115 = vld [vmem:[%s1 + $0xc] sm:$0xf]
    %v116 = vld [vmem:[%s2] sm:$0x1]
    %v118 = vperm.slane %v116, 0
    %v124 = vunpack.c.l.b16 %v112
    %v125 = vunpack.c.l.b16 %v113
    %v126 = vunpack.c.l.b16 %v114
    %v127 = vunpack.c.l.b16 %v115
    %v128 = vpack.c.b16 %v125, %v124
    %v129 = vpack.c.b16 %v127, %v126
    %vm132 = vcmask 261120
    %v134 = vsel %vm132, %v111, 0
    %136 = vmatpush.bf16.msra.mxu0 0
    %137 = vmatpush.bf16.msra.mxu0 0
    %138 = vmatpush.bf16.msra.mxu0 0
    %139 = vmatpush.bf16.msra.mxu0 0
    %140 = vmatpush.bf16.msra.mxu0 0
    %141 = vmatpush.bf16.msra.mxu0 0
    %142 = vmatpush.bf16.msra.mxu0 %v129
    %143 = vmatpush.bf16.msra.mxu0 %v128
    %144 = vmatmul.bf16.gmra.mxu0 %v134
    %v145 = vpop.f32.mrf.mxu0
    %v146 = vadd.f32 %v118, %v145
    %v147 = vpop.f32.mrf.mxu0
    %v148 = vadd.f32 %v118, %v147
    %149 = vdwg.mxu0
    %v150 = vpack.c.bf16 %v146, %v146
    %v151 = vpack.c.bf16 %v148, %v148
    %154 = vrot.lane.b32.xlu0 %v150, 120
    %v155 = vpop.permute.xlu0 %154
    %156 = vrot.lane.b32.xlu0 %v151, 120
    %v157 = vpop.permute.xlu0 %156
    %158 = vrot.lane.b32.xlu0 %v150, 112
    %v159 = vpop.permute.xlu0 %158
    %160 = vrot.lane.b32.xlu0 %v151, 112
    %v161 = vpop.permute.xlu0 %160
    %162 = vrot.lane.b32.xlu0 %v150, 104
    %v163 = vpop.permute.xlu0 %162
    %164 = vrot.lane.b32.xlu0 %v151, 104
    %v165 = vpop.permute.xlu0 %164
    %v166 = vunpack.c.l.b16 %v150
    %v167 = vpack.c.b16 %v166, %v166
    %168 = vrot.lane.b32.xlu0 %v167, 96
    %v169 = vpop.permute.xlu0 %168
    %vm170 = vcmask 64512
    %v172 = vsel %vm170, %v150, 0
    %v175 = vsel %vm170, %v169, 0
    %177 = vmatpush.bf16.xpose.msra.mxu0 0
    %178 = vmatpush.bf16.xpose.msra.mxu0 0
    %179 = vmatpush.bf16.xpose.msra.mxu0 0
    %180 = vmatpush.bf16.xpose.msra.mxu0 0
    %181 = vmatpush.bf16.xpose.msra.mxu0 0
    %182 = vmatpush.bf16.xpose.msra.mxu0 0
    %183 = vmatpush.bf16.xpose.msra.mxu0 0
    %184 = vmatpush.bf16.xpose.msra.mxu0 %v175
    %185 = vmatmul.bf16.gmra.mxu0 %v172
    %v186 = vpop.f32.mrf.mxu0
    %v187 = vadd.f32 0.0, %v186
    %v188 = vpop.f32.mrf.mxu0
    %189 = vdwg.mxu0
    %v190 = vunpack.c.l.b16 %v151
    %v191 = vpack.c.b16 %v190, %v190
    %192 = vrot.lane.b32.xlu0 %v191, 96
    %v193 = vpop.permute.xlu0 %192
    %v195 = vsel %vm170, %v151, 0
    %v198 = vsel %vm170, %v193, 0
    %200 = vmatpush.bf16.xpose.msra.mxu0 0
    %201 = vmatpush.bf16.xpose.msra.mxu0 0
    %202 = vmatpush.bf16.xpose.msra.mxu0 0
    %203 = vmatpush.bf16.xpose.msra.mxu0 0
    %204 = vmatpush.bf16.xpose.msra.mxu0 0
    %205 = vmatpush.bf16.xpose.msra.mxu0 0
    %206 = vmatpush.bf16.xpose.msra.mxu0 0
    %207 = vmatpush.bf16.xpose.msra.mxu0 %v198
    %208 = vmatmul.bf16.gmra.mxu0 %v195
    %v209 = vpop.f32.mrf.mxu0
    %v210 = vadd.f32 0.0, %v209
    %v211 = vpop.f32.mrf.mxu0
    %212 = vdwg.mxu0
    %v213 = vunpack.c.l.b16 %v155
    %v214 = vpack.c.b16 %v213, %v213
    %215 = vrot.lane.b32.xlu0 %v214, 96
    %v216 = vpop.permute.xlu0 %215
    %v218 = vsel %vm170, %v155, 0
    %v221 = vsel %vm170, %v216, 0
    %223 = vmatpush.bf16.xpose.msra.mxu0 0
    %224 = vmatpush.bf16.xpose.msra.mxu0 0
    %225 = vmatpush.bf16.xpose.msra.mxu0 0
    %226 = vmatpush.bf16.xpose.msra.mxu0 0
    %227 = vmatpush.bf16.xpose.msra.mxu0 0
    %228 = vmatpush.bf16.xpose.msra.mxu0 0
    %229 = vmatpush.bf16.xpose.msra.mxu0 0
    %230 = vmatpush.bf16.xpose.msra.mxu0 %v221
    %231 = vmatmul.bf16.gmra.mxu0 %v218
    %v232 = vpop.f32.mrf.mxu0
    %v233 = vadd.f32 0.0, %v232
    %v234 = vpop.f32.mrf.mxu0
    %235 = vdwg.mxu0
    %v236 = vunpack.c.l.b16 %v157
    %v237 = vpack.c.b16 %v236, %v236
    %238 = vrot.lane.b32.xlu0 %v237, 96
    %v239 = vpop.permute.xlu0 %238
    %v241 = vsel %vm170, %v157, 0
    %v244 = vsel %vm170, %v239, 0
    %246 = vmatpush.bf16.xpose.msra.mxu0 0
    %247 = vmatpush.bf16.xpose.msra.mxu0 0
    %248 = vmatpush.bf16.xpose.msra.mxu0 0
    %249 = vmatpush.bf16.xpose.msra.mxu0 0
    %250 = vmatpush.bf16.xpose.msra.mxu0 0
    %251 = vmatpush.bf16.xpose.msra.mxu0 0
    %252 = vmatpush.bf16.xpose.msra.mxu0 0
    %253 = vmatpush.bf16.xpose.msra.mxu0 %v244
    %254 = vmatmul.bf16.gmra.mxu0 %v241
    %v255 = vpop.f32.mrf.mxu0
    %v256 = vadd.f32 0.0, %v255
    %v257 = vpop.f32.mrf.mxu0
    %258 = vdwg.mxu0
    %v259 = vunpack.c.l.b16 %v159
    %v260 = vpack.c.b16 %v259, %v259
    %261 = vrot.lane.b32.xlu0 %v260, 96
    %v262 = vpop.permute.xlu0 %261
    %v264 = vsel %vm170, %v159, 0
    %v267 = vsel %vm170, %v262, 0
    %269 = vmatpush.bf16.xpose.msra.mxu0 0
    %270 = vmatpush.bf16.xpose.msra.mxu0 0
    %271 = vmatpush.bf16.xpose.msra.mxu0 0
    %272 = vmatpush.bf16.xpose.msra.mxu0 0
    %273 = vmatpush.bf16.xpose.msra.mxu0 0
    %274 = vmatpush.bf16.xpose.msra.mxu0 0
    %275 = vmatpush.bf16.xpose.msra.mxu0 0
    %276 = vmatpush.bf16.xpose.msra.mxu0 %v267
    %277 = vmatmul.bf16.gmra.mxu0 %v264
    %v278 = vpop.f32.mrf.mxu0
    %v279 = vadd.f32 0.0, %v278
    %v280 = vpop.f32.mrf.mxu0
    %281 = vdwg.mxu0
    %v282 = vunpack.c.l.b16 %v161
    %v283 = vpack.c.b16 %v282, %v282
    %284 = vrot.lane.b32.xlu0 %v283, 96
    %v285 = vpop.permute.xlu0 %284
    %v287 = vsel %vm170, %v161, 0
    %v290 = vsel %vm170, %v285, 0
    %292 = vmatpush.bf16.xpose.msra.mxu0 0
    %293 = vmatpush.bf16.xpose.msra.mxu0 0
    %294 = vmatpush.bf16.xpose.msra.mxu0 0
    %295 = vmatpush.bf16.xpose.msra.mxu0 0
    %296 = vmatpush.bf16.xpose.msra.mxu0 0
    %297 = vmatpush.bf16.xpose.msra.mxu0 0
    %298 = vmatpush.bf16.xpose.msra.mxu0 0
    %299 = vmatpush.bf16.xpose.msra.mxu0 %v290
    %300 = vmatmul.bf16.gmra.mxu0 %v287
    %v301 = vpop.f32.mrf.mxu0
    %v302 = vadd.f32 0.0, %v301
    %v303 = vpop.f32.mrf.mxu0
    %304 = vdwg.mxu0
    %v305 = vunpack.c.l.b16 %v163
    %v306 = vpack.c.b16 %v305, %v305
    %307 = vrot.lane.b32.xlu0 %v306, 96
    %v308 = vpop.permute.xlu0 %307
    %v310 = vsel %vm170, %v163, 0
    %v313 = vsel %vm170, %v308, 0
    %315 = vmatpush.bf16.xpose.msra.mxu0 0
    %316 = vmatpush.bf16.xpose.msra.mxu0 0
    %317 = vmatpush.bf16.xpose.msra.mxu0 0
    %318 = vmatpush.bf16.xpose.msra.mxu0 0
    %319 = vmatpush.bf16.xpose.msra.mxu0 0
    %320 = vmatpush.bf16.xpose.msra.mxu0 0
    %321 = vmatpush.bf16.xpose.msra.mxu0 0
    %322 = vmatpush.bf16.xpose.msra.mxu0 %v313
    %323 = vmatmul.bf16.gmra.mxu0 %v310
    %v324 = vpop.f32.mrf.mxu0
    %v325 = vadd.f32 0.0, %v324
    %v326 = vpop.f32.mrf.mxu0
    %327 = vdwg.mxu0
    %v328 = vunpack.c.l.b16 %v165
    %v329 = vpack.c.b16 %v328, %v328
    %330 = vrot.lane.b32.xlu0 %v329, 96
    %v331 = vpop.permute.xlu0 %330
    %v333 = vsel %vm170, %v165, 0
    %v336 = vsel %vm170, %v331, 0
    %338 = vmatpush.bf16.xpose.msra.mxu0 0
    %339 = vmatpush.bf16.xpose.msra.mxu0 0
    %340 = vmatpush.bf16.xpose.msra.mxu0 0
    %341 = vmatpush.bf16.xpose.msra.mxu0 0
    %342 = vmatpush.bf16.xpose.msra.mxu0 0
    %343 = vmatpush.bf16.xpose.msra.mxu0 0
    %344 = vmatpush.bf16.xpose.msra.mxu0 0
    %345 = vmatpush.bf16.xpose.msra.mxu0 %v336
    %346 = vmatmul.bf16.gmra.mxu0 %v333
    %v347 = vpop.f32.mrf.mxu0
    %v348 = vadd.f32 0.0, %v347
    %v349 = vpop.f32.mrf.mxu0
    %350 = vdwg.mxu0
    %v351 = vmul.f32 %v187, 0.35355338
    %v352 = vmul.f32 %v210, 0.35355338
    %v353 = vmul.f32 %v233, 0.35355338
    %v354 = vmul.f32 %v256, 0.35355338
    %v355 = vmul.f32 %v279, 0.35355338
    %v356 = vmul.f32 %v302, 0.35355338
    %v357 = vmul.f32 %v325, 0.35355338
    %v358 = vmul.f32 %v348, 0.35355338
    %v359 = vsel %vm170, %v351, -inf
    %360 = vmax.xlane.f32.xlu0 %v359
    %v361 = vpop.xlane.xlu0 %360
    %v362 = vsel %vm170, %v352, -inf
    %363 = vmax.xlane.f32.xlu0 %v362
    %v364 = vpop.xlane.xlu0 %363
    %v365 = vsel %vm170, %v353, -inf
    %366 = vmax.xlane.f32.xlu0 %v365
    %v367 = vpop.xlane.xlu0 %366
    %v368 = vsel %vm170, %v354, -inf
    %369 = vmax.xlane.f32.xlu0 %v368
    %v370 = vpop.xlane.xlu0 %369
    %v371 = vsel %vm170, %v355, -inf
    %372 = vmax.xlane.f32.xlu0 %v371
    %v373 = vpop.xlane.xlu0 %372
    %v374 = vsel %vm170, %v356, -inf
    %375 = vmax.xlane.f32.xlu0 %v374
    %v376 = vpop.xlane.xlu0 %375
    %v377 = vsel %vm170, %v357, -inf
    %378 = vmax.xlane.f32.xlu0 %v377
    %v379 = vpop.xlane.xlu0 %378
    %v380 = vsel %vm170, %v358, -inf
    %381 = vmax.xlane.f32.xlu0 %v380
    %v382 = vpop.xlane.xlu0 %381
    %v383 = vsub.f32 %v351, %v361
    %v384 = vsub.f32 %v352, %v364
    %v385 = vsub.f32 %v353, %v367
    %v386 = vsub.f32 %v354, %v370
    %v387 = vsub.f32 %v355, %v373
    %v388 = vsub.f32 %v356, %v376
    %v389 = vsub.f32 %v357, %v379
    %v390 = vsub.f32 %v358, %v382
    %v391 = vmul.f32 %v383, 1.442695
    %v392 = vpow.pop %v391
    %v393 = vmul.f32 %v384, 1.442695
    %v394 = vpow.pop %v393
    %v395 = vmul.f32 %v385, 1.442695
    %v396 = vpow.pop %v395
    %v397 = vmul.f32 %v386, 1.442695
    %v398 = vpow.pop %v397
    %v399 = vmul.f32 %v387, 1.442695
    %v400 = vpow.pop %v399
    %v401 = vmul.f32 %v388, 1.442695
    %v402 = vpow.pop %v401
    %v403 = vmul.f32 %v389, 1.442695
    %v404 = vpow.pop %v403
    %v405 = vmul.f32 %v390, 1.442695
    %v406 = vpow.pop %v405
    %v407 = vsel %vm170, %v392, 0.0
    %408 = vadd.xlane.f32.xlu0 %v407
    %v409 = vpop.xlane.xlu0 %408
    %v410 = vsel %vm170, %v394, 0.0
    %411 = vadd.xlane.f32.xlu0 %v410
    %v412 = vpop.xlane.xlu0 %411
    %v413 = vsel %vm170, %v396, 0.0
    %414 = vadd.xlane.f32.xlu0 %v413
    %v415 = vpop.xlane.xlu0 %414
    %v416 = vsel %vm170, %v398, 0.0
    %417 = vadd.xlane.f32.xlu0 %v416
    %v418 = vpop.xlane.xlu0 %417
    %v419 = vsel %vm170, %v400, 0.0
    %420 = vadd.xlane.f32.xlu0 %v419
    %v421 = vpop.xlane.xlu0 %420
    %v422 = vsel %vm170, %v402, 0.0
    %423 = vadd.xlane.f32.xlu0 %v422
    %v424 = vpop.xlane.xlu0 %423
    %v425 = vsel %vm170, %v404, 0.0
    %426 = vadd.xlane.f32.xlu0 %v425
    %v427 = vpop.xlane.xlu0 %426
    %v428 = vsel %vm170, %v406, 0.0
    %429 = vadd.xlane.f32.xlu0 %v428
    %v430 = vpop.xlane.xlu0 %429
    %v431 = vrcp.pop %v409
    %v432 = vrcp.pop %v412
    %v433 = vrcp.pop %v415
    %v434 = vrcp.pop %v418
    %v435 = vrcp.pop %v421
    %v436 = vrcp.pop %v424
    %v437 = vrcp.pop %v427
    %v438 = vrcp.pop %v430
    %v439 = vmul.f32 %v392, %v431
    %v440 = vmul.f32 %v394, %v432
    %v441 = vmul.f32 %v396, %v433
    %v442 = vmul.f32 %v398, %v434
    %v443 = vmul.f32 %v400, %v435
    %v444 = vmul.f32 %v402, %v436
    %v445 = vmul.f32 %v404, %v437
    %v446 = vmul.f32 %v406, %v438
    %v447 = vpack.c.bf16 %v439, %v439
    %v448 = vpack.c.bf16 %v440, %v440
    %v449 = vpack.c.bf16 %v441, %v441
    %v450 = vpack.c.bf16 %v442, %v442
    %v451 = vpack.c.bf16 %v443, %v443
    %v452 = vpack.c.bf16 %v444, %v444
    %v453 = vpack.c.bf16 %v445, %v445
    %v454 = vpack.c.bf16 %v446, %v446
    %455 = vrot.lane.b32.xlu0 %v167, 64
    %v456 = vpop.permute.xlu0 %455
    %v458 = vsel %vm170, %v447, 0
    %vm460 = vcmask 1043456
    %v462 = vsel %vm460, %v456, 0
    %464 = vmatpush.bf16.msra.mxu0 0
    %465 = vmatpush.bf16.msra.mxu0 0
    %466 = vmatpush.bf16.msra.mxu0 0
    %467 = vmatpush.bf16.msra.mxu0 0
    %468 = vmatpush.bf16.msra.mxu0 0
    %469 = vmatpush.bf16.msra.mxu0 0
    %470 = vmatpush.bf16.msra.mxu0 0
    %471 = vmatpush.bf16.msra.mxu0 %v462
    %472 = vmatmul.bf16.gmra.mxu0 %v458
    %v473 = vpop.f32.mrf.mxu0
    %v474 = vadd.f32 0.0, %v473
    %v475 = vpop.f32.mrf.mxu0
    %476 = vdwg.mxu0
    %477 = vrot.lane.b32.xlu0 %v191, 64
    %v478 = vpop.permute.xlu0 %477
    %v480 = vsel %vm170, %v448, 0
    %v483 = vsel %vm460, %v478, 0
    %485 = vmatpush.bf16.msra.mxu0 0
    %486 = vmatpush.bf16.msra.mxu0 0
    %487 = vmatpush.bf16.msra.mxu0 0
    %488 = vmatpush.bf16.msra.mxu0 0
    %489 = vmatpush.bf16.msra.mxu0 0
    %490 = vmatpush.bf16.msra.mxu0 0
    %491 = vmatpush.bf16.msra.mxu0 0
    %492 = vmatpush.bf16.msra.mxu0 %v483
    %493 = vmatmul.bf16.gmra.mxu0 %v480
    %v494 = vpop.f32.mrf.mxu0
    %v495 = vadd.f32 0.0, %v494
    %v496 = vpop.f32.mrf.mxu0
    %497 = vdwg.mxu0
    %498 = vrot.lane.b32.xlu0 %v214, 64
    %v499 = vpop.permute.xlu0 %498
    %v501 = vsel %vm170, %v449, 0
    %v504 = vsel %vm460, %v499, 0
    %506 = vmatpush.bf16.msra.mxu0 0
    %507 = vmatpush.bf16.msra.mxu0 0
    %508 = vmatpush.bf16.msra.mxu0 0
    %509 = vmatpush.bf16.msra.mxu0 0
    %510 = vmatpush.bf16.msra.mxu0 0
    %511 = vmatpush.bf16.msra.mxu0 0
    %512 = vmatpush.bf16.msra.mxu0 0
    %513 = vmatpush.bf16.msra.mxu0 %v504
    %514 = vmatmul.bf16.gmra.mxu0 %v501
    %v515 = vpop.f32.mrf.mxu0
    %v516 = vadd.f32 0.0, %v515
    %v517 = vpop.f32.mrf.mxu0
    %518 = vdwg.mxu0
    %519 = vrot.lane.b32.xlu0 %v237, 64
    %v520 = vpop.permute.xlu0 %519
    %v522 = vsel %vm170, %v450, 0
    %v525 = vsel %vm460, %v520, 0
    %527 = vmatpush.bf16.msra.mxu0 0
    %528 = vmatpush.bf16.msra.mxu0 0
    %529 = vmatpush.bf16.msra.mxu0 0
    %530 = vmatpush.bf16.msra.mxu0 0
    %531 = vmatpush.bf16.msra.mxu0 0
    %532 = vmatpush.bf16.msra.mxu0 0
    %533 = vmatpush.bf16.msra.mxu0 0
    %534 = vmatpush.bf16.msra.mxu0 %v525
    %535 = vmatmul.bf16.gmra.mxu0 %v522
    %v536 = vpop.f32.mrf.mxu0
    %v537 = vadd.f32 0.0, %v536
    %v538 = vpop.f32.mrf.mxu0
    %539 = vdwg.mxu0
    %540 = vrot.lane.b32.xlu0 %v260, 64
    %v541 = vpop.permute.xlu0 %540
    %v543 = vsel %vm170, %v451, 0
    %v546 = vsel %vm460, %v541, 0
    %548 = vmatpush.bf16.msra.mxu0 0
    %549 = vmatpush.bf16.msra.mxu0 0
    %550 = vmatpush.bf16.msra.mxu0 0
    %551 = vmatpush.bf16.msra.mxu0 0
    %552 = vmatpush.bf16.msra.mxu0 0
    %553 = vmatpush.bf16.msra.mxu0 0
    %554 = vmatpush.bf16.msra.mxu0 0
    %555 = vmatpush.bf16.msra.mxu0 %v546
    %556 = vmatmul.bf16.gmra.mxu0 %v543
    %v557 = vpop.f32.mrf.mxu0
    %v558 = vadd.f32 0.0, %v557
    %v559 = vpop.f32.mrf.mxu0
    %560 = vdwg.mxu0
    %561 = vrot.lane.b32.xlu0 %v283, 64
    %v562 = vpop.permute.xlu0 %561
    %v564 = vsel %vm170, %v452, 0
    %v567 = vsel %vm460, %v562, 0
    %569 = vmatpush.bf16.msra.mxu0 0
    %570 = vmatpush.bf16.msra.mxu0 0
    %571 = vmatpush.bf16.msra.mxu0 0
    %572 = vmatpush.bf16.msra.mxu0 0
    %573 = vmatpush.bf16.msra.mxu0 0
    %574 = vmatpush.bf16.msra.mxu0 0
    %575 = vmatpush.bf16.msra.mxu0 0
    %576 = vmatpush.bf16.msra.mxu0 %v567
    %577 = vmatmul.bf16.gmra.mxu0 %v564
    %v578 = vpop.f32.mrf.mxu0
    %v579 = vadd.f32 0.0, %v578
    %v580 = vpop.f32.mrf.mxu0
    %581 = vdwg.mxu0
    %582 = vrot.lane.b32.xlu0 %v306, 64
    %v583 = vpop.permute.xlu0 %582
    %v585 = vsel %vm170, %v453, 0
    %v588 = vsel %vm460, %v583, 0
    %590 = vmatpush.bf16.msra.mxu0 0
    %591 = vmatpush.bf16.msra.mxu0 0
    %592 = vmatpush.bf16.msra.mxu0 0
    %593 = vmatpush.bf16.msra.mxu0 0
    %594 = vmatpush.bf16.msra.mxu0 0
    %595 = vmatpush.bf16.msra.mxu0 0
    %596 = vmatpush.bf16.msra.mxu0 0
    %597 = vmatpush.bf16.msra.mxu0 %v588
    %598 = vmatmul.bf16.gmra.mxu0 %v585
    %v599 = vpop.f32.mrf.mxu0
    %v600 = vadd.f32 0.0, %v599
    %v601 = vpop.f32.mrf.mxu0
    %602 = vdwg.mxu0
    %603 = vrot.lane.b32.xlu0 %v329, 64
    %v604 = vpop.permute.xlu0 %603
    %v606 = vsel %vm170, %v454, 0
    %v609 = vsel %vm460, %v604, 0
    %611 = vmatpush.bf16.msra.mxu0 0
    %612 = vmatpush.bf16.msra.mxu0 0
    %613 = vmatpush.bf16.msra.mxu0 0
    %614 = vmatpush.bf16.msra.mxu0 0
    %615 = vmatpush.bf16.msra.mxu0 0
    %616 = vmatpush.bf16.msra.mxu0 0
    %617 = vmatpush.bf16.msra.mxu0 0
    %618 = vmatpush.bf16.msra.mxu0 %v609
    %619 = vmatmul.bf16.gmra.mxu0 %v606
    %v620 = vpop.f32.mrf.mxu0
    %v621 = vadd.f32 0.0, %v620
    %v622 = vpop.f32.mrf.mxu0
    %623 = vdwg.mxu0
    %626 = vrot.lane.b32.xlu0 %v516, 8
    %v627 = vpop.permute.xlu0 %626
    %628 = vrot.lane.b32.xlu0 %v537, 8
    %v629 = vpop.permute.xlu0 %628
    %634 = vrot.lane.b32.xlu0 %v558, 16
    %v635 = vpop.permute.xlu0 %634
    %636 = vrot.lane.b32.xlu0 %v579, 16
    %v637 = vpop.permute.xlu0 %636
    %642 = vrot.lane.b32.xlu0 %v600, 24
    %v643 = vpop.permute.xlu0 %642
    %644 = vrot.lane.b32.xlu0 %v621, 24
    %v645 = vpop.permute.xlu0 %644
    %v648 = vsel %vm170, %v474, %v627
    %v649 = vsel %vm170, %v495, %v629
    %vm650 = vcmask 130048
    %v651 = vsel %vm650, %v648, %v635
    %v652 = vsel %vm650, %v649, %v637
    %vm653 = vcmask 195584
    %v654 = vsel %vm653, %v651, %v643
    %v655 = vsel %vm653, %v652, %v645
    %v656 = vpack.c.bf16 %v655, %v654
    %v657 = vld [vmem:[%s3] sm:$0xf]
    %v658 = vld [vmem:[%s3 + $0x4] sm:$0xf]
    %v659 = vld [vmem:[%s3 + $0x8] sm:$0xf]
    %v660 = vld [vmem:[%s3 + $0xc] sm:$0xf]
    %v661 = vld [vmem:[%s4] sm:$0x1]
    %v663 = vperm.slane %v661, 0
    %v669 = vunpack.c.l.b16 %v657
    %v670 = vunpack.c.l.b16 %v658
    %v671 = vunpack.c.l.b16 %v659
    %v672 = vunpack.c.l.b16 %v660
    %v673 = vpack.c.b16 %v670, %v669
    %v674 = vpack.c.b16 %v672, %v671
    %v678 = vsel %vm132, %v656, 0
    %680 = vmatpush.bf16.msra.mxu0 0
    %681 = vmatpush.bf16.msra.mxu0 0
    %682 = vmatpush.bf16.msra.mxu0 0
    %683 = vmatpush.bf16.msra.mxu0 0
    %684 = vmatpush.bf16.msra.mxu0 0
    %685 = vmatpush.bf16.msra.mxu0 0
    %686 = vmatpush.bf16.msra.mxu0 %v674
    %687 = vmatpush.bf16.msra.mxu0 %v673
    %688 = vmatmul.bf16.gmra.mxu0 %v678
    %v689 = vpop.f32.mrf.mxu0
    %v690 = vadd.f32 %v663, %v689
    %v691 = vpop.f32.mrf.mxu0
    %v692 = vadd.f32 %v663, %v691
    %693 = vdwg.mxu0
    %v694 = vadd.f32 %v108, %v690
    %v695 = vadd.f32 %v110, %v692
    %v696 = vld [vmem:[%s5] sm:$0x1]
    %v697 = vld [vmem:[%s6] sm:$0x1]
    %v698 = vsel %vm132, %v694, 0.0
    %699 = vadd.xlane.f32.xlu0 %v698
    %v700 = vpop.xlane.xlu0 %699
    %v701 = vsel %vm132, %v695, 0.0
    %702 = vadd.xlane.f32.xlu0 %v701
    %v703 = vpop.xlane.xlu0 %702
    %v704 = vrcp.pop 32.0
    %v705 = vmul.f32 32.0, %v704
    %v706 = vsub.f32 1.0, %v705
    %v707 = vmul.f32 %v704, %v706
    %v708 = vadd.f32 %v704, %v707
    %vm709 = vweird.f32 %v704
    %v710 = vsel %vm709, %v704, %v708
    %v711 = vmul.f32 %v700, %v710
    %v712 = vmul.f32 %v703, %v710
    %v713 = vsub.f32 %v694, %v711
    %v714 = vsub.f32 %v695, %v712
    %v715 = vmul.f32 %v713, %v713
    %v716 = vmul.f32 %v714, %v714
    %v717 = vsel %vm132, %v715, 0.0
    %718 = vadd.xlane.f32.xlu0 %v717
    %v719 = vpop.xlane.xlu0 %718
    %v720 = vsel %vm132, %v716, 0.0
    %721 = vadd.xlane.f32.xlu0 %v720
    %v722 = vpop.xlane.xlu0 %721
    %v723 = vmul.f32 %v719, %v710
    %v724 = vmul.f32 %v722, %v710
    %v725 = vadd.f32 %v723, 1e-05
    %v726 = vadd.f32 %v724, 1e-05
    %v727 = vrsqrt.pop %v725
    %v728 = vmul.f32 %v727, %v725
    %v729 = vmul.f32 %v728, %v727
    %v730 = vmul.f32 0.5, %v729
    %v731 = vsub.f32 1.5, %v730
    %v732 = vmul.f32 %v727, %v731
    %vm733 = vweird.f32 %v725
    %vm734 = vweird.f32 %v727
    %vm735 = vmor %vm733, %vm734
    %v736 = vsel %vm735, %v727, %v732
    %v737 = vrsqrt.pop %v726
    %v738 = vmul.f32 %v737, %v726
    %v739 = vmul.f32 %v738, %v737
    %v740 = vmul.f32 0.5, %v739
    %v741 = vsub.f32 1.5, %v740
    %v742 = vmul.f32 %v737, %v741
    %vm743 = vweird.f32 %v726
    %vm744 = vweird.f32 %v737
    %vm745 = vmor %vm743, %vm744
    %v746 = vsel %vm745, %v737, %v742
    %v747 = vmul.f32 %v713, %v736
    %v748 = vmul.f32 %v714, %v746
    %v750 = vperm.slane %v696, 0
    %v752 = vmul.f32 %v747, %v750
    %v753 = vmul.f32 %v748, %v750
    %v755 = vperm.slane %v697, 0
    %v757 = vadd.f32 %v752, %v755
    %v758 = vadd.f32 %v753, %v755
    %v759 = vpack.c.bf16 %v758, %v757
    %v760 = vld [vmem:[#allocation2] sm:$0xf]
    %v761 = vld [vmem:[#allocation2 + $0x4] sm:$0xf]
    %v762 = vld [vmem:[#allocation2 + $0x8] sm:$0xf]
    %v763 = vld [vmem:[#allocation2 + $0xc] sm:$0xf]
    %v764 = vld [vmem:[%s8] sm:$0x1]
    %v766 = vperm.slane %v764, 0
    %v772 = vunpack.c.l.b16 %v760
    %v773 = vunpack.c.l.b16 %v761
    %v774 = vunpack.c.l.b16 %v762
    %v775 = vunpack.c.l.b16 %v763
    %v776 = vpack.c.b16 %v773, %v772
    %v777 = vpack.c.b16 %v775, %v774
    %v781 = vsel %vm132, %v759, 0
    %783 = vmatpush.bf16.msra.mxu0 0
    %784 = vmatpush.bf16.msra.mxu0 0
    %785 = vmatpush.bf16.msra.mxu0 0
    %786 = vmatpush.bf16.msra.mxu0 0
    %787 = vmatpush.bf16.msra.mxu0 0
    %788 = vmatpush.bf16.msra.mxu0 0
    %789 = vmatpush.bf16.msra.mxu0 %v777
    %790 = vmatpush.bf16.msra.mxu0 %v776
    %791 = vmatmul.bf16.gmra.mxu0 %v781
    %v792 = vpop.f32.mrf.mxu0
    %v793 = vadd.f32 %v766, %v792
    %v794 = vpop.f32.mrf.mxu0
    %v795 = vadd.f32 %v766, %v794
    %796 = vdwg.mxu0
    %v797 = vmul.f32 %v793, 0.5
    %v798 = vmul.f32 %v795, 0.5
    %v799 = vmul.f32 %v793, 0.70710677
    %v800 = vmul.f32 %v795, 0.70710677
    %v801 = vmul.f32 %v799, %v799
    %v802 = vmin.f32 16.0, %v801
    %v803 = vmul.f32 %v802, 2.1237322e-06
    %v804 = vadd.f32 %v803, 0.00028619796
    %v805 = vmul.f32 %v802, %v804
    %v806 = vadd.f32 %v805, 0.0036580483
    %v807 = vmul.f32 %v802, %v806
    %v808 = vadd.f32 %v807, 0.05243302
    %v809 = vmul.f32 %v802, %v808
    %v810 = vadd.f32 %v809, 0.18741608
    %v811 = vmul.f32 %v802, %v810
    %v812 = vadd.f32 %v811, 1.1283791
    %v813 = vmul.f32 %v799, %v812
    %v814 = vmul.f32 %v802, 3.8918573e-05
    %v815 = vadd.f32 %v814, 0.001143296
    %v816 = vmul.f32 %v802, %v815
    %v817 = vadd.f32 %v816, 0.014752088
    %v818 = vmul.f32 %v802, %v817
    %v819 = vadd.f32 %v818, 0.112945676
    %v820 = vmul.f32 %v802, %v819
    %v821 = vadd.f32 %v820, 0.4994258
    %v822 = vmul.f32 %v802, %v821
    %v823 = vadd.f32 %v822, 1.0
    %v824 = vrcp.pop %v823
    %v825 = vmul.f32 %v823, %v824
    %v826 = vsub.f32 1.0, %v825
    %v827 = vmul.f32 %v824, %v826
    %v828 = vadd.f32 %v824, %v827
    %vm829 = vweird.f32 %v823
    %vm830 = vweird.f32 %v824
    %vm831 = vmor %vm829, %vm830
    %v832 = vsel %vm831, %v824, %v828
    %v833 = vand.u32 2147483647, %v823
    %vm834 = vcmp.eq.f32.partialorder %v833, 8.507059e+37
    %v835 = vand.u32 %v823, 2147483648
    %v836 = vor.u32 1.1754944e-38, %v835
    %v837 = vsel %vm834, %v836, %v832
    %v838 = vmul.f32 %v813, %v837
    %v839 = vmin.f32 %v838, 1.0
    %v840 = vmax.f32 %v839, -1.0
    %v841 = vmul.f32 %v800, %v800
    %v842 = vmin.f32 16.0, %v841
    %v843 = vmul.f32 %v842, 2.1237322e-06
    %v844 = vadd.f32 %v843, 0.00028619796
    %v845 = vmul.f32 %v842, %v844
    %v846 = vadd.f32 %v845, 0.0036580483
    %v847 = vmul.f32 %v842, %v846
    %v848 = vadd.f32 %v847, 0.05243302
    %v849 = vmul.f32 %v842, %v848
    %v850 = vadd.f32 %v849, 0.18741608
    %v851 = vmul.f32 %v842, %v850
    %v852 = vadd.f32 %v851, 1.1283791
    %v853 = vmul.f32 %v800, %v852
    %v854 = vmul.f32 %v842, 3.8918573e-05
    %v855 = vadd.f32 %v854, 0.001143296
    %v856 = vmul.f32 %v842, %v855
    %v857 = vadd.f32 %v856, 0.014752088
    %v858 = vmul.f32 %v842, %v857
    %v859 = vadd.f32 %v858, 0.112945676
    %v860 = vmul.f32 %v842, %v859
    %v861 = vadd.f32 %v860, 0.4994258
    %v862 = vmul.f32 %v842, %v861
    %v863 = vadd.f32 %v862, 1.0
    %v864 = vrcp.pop %v863
    %v865 = vmul.f32 %v863, %v864
    %v866 = vsub.f32 1.0, %v865
    %v867 = vmul.f32 %v864, %v866
    %v868 = vadd.f32 %v864, %v867
    %vm869 = vweird.f32 %v863
    %vm870 = vweird.f32 %v864
    %vm871 = vmor %vm869, %vm870
    %v872 = vsel %vm871, %v864, %v868
    %v873 = vand.u32 2147483647, %v863
    %vm874 = vcmp.eq.f32.partialorder %v873, 8.507059e+37
    %v875 = vand.u32 %v863, 2147483648
    %v876 = vor.u32 1.1754944e-38, %v875
    %v877 = vsel %vm874, %v876, %v872
    %v878 = vmul.f32 %v853, %v877
    %v879 = vmin.f32 %v878, 1.0
    %v880 = vmax.f32 %v879, -1.0
    %v881 = vadd.f32 %v840, 1.0
    %v882 = vadd.f32 %v880, 1.0
    %v883 = vmul.f32 %v797, %v881
    %v884 = vmul.f32 %v798, %v882
    %v885 = vpack.c.bf16 %v884, %v883
    %v886 = vld [vmem:[%s9] sm:$0xf]
    %v887 = vld [vmem:[%s9 + $0x4] sm:$0xf]
    %v888 = vld [vmem:[%s9 + $0x8] sm:$0xf]
    %v889 = vld [vmem:[%s9 + $0xc] sm:$0xf]
    %v890 = vld [vmem:[%s9 + $0x10] sm:$0xf]
    %v891 = vld [vmem:[%s9 + $0x14] sm:$0xf]
    %v892 = vld [vmem:[%s9 + $0x18] sm:$0xf]
    %v893 = vld [vmem:[%s9 + $0x1c] sm:$0xf]
    %v894 = vld [vmem:[%s10] sm:$0x1]
    %v896 = vperm.slane %v894, 0
    %v906 = vunpack.c.l.b16 %v886
    %v907 = vunpack.c.l.b16 %v887
    %v908 = vunpack.c.l.b16 %v888
    %v909 = vunpack.c.l.b16 %v889
    %v910 = vunpack.c.l.b16 %v890
    %v911 = vunpack.c.l.b16 %v891
    %v912 = vunpack.c.l.b16 %v892
    %v913 = vunpack.c.l.b16 %v893
    %v914 = vpack.c.b16 %v907, %v906
    %v915 = vpack.c.b16 %v909, %v908
    %v916 = vpack.c.b16 %v911, %v910
    %v917 = vpack.c.b16 %v913, %v912
    %vm922 = vcmask 523264
    %v924 = vsel %vm922, %v885, 0
    %926 = vmatpush.bf16.msra.mxu0 0
    %927 = vmatpush.bf16.msra.mxu0 0
    %928 = vmatpush.bf16.msra.mxu0 0
    %929 = vmatpush.bf16.msra.mxu0 0
    %930 = vmatpush.bf16.msra.mxu0 %v917
    %931 = vmatpush.bf16.msra.mxu0 %v916
    %932 = vmatpush.bf16.msra.mxu0 %v915
    %933 = vmatpush.bf16.msra.mxu0 %v914
    %934 = vmatmul.bf16.gmra.mxu0 %v924
    %v935 = vpop.f32.mrf.mxu0
    %v936 = vadd.f32 %v896, %v935
    %v937 = vpop.f32.mrf.mxu0
    %v938 = vadd.f32 %v896, %v937
    %939 = vdwg.mxu0
    %v940 = vadd.f32 %v757, %v936
    %v941 = vadd.f32 %v758, %v938
    %v942 = vld [vmem:[%s11] sm:$0x1]
    %v943 = vld [vmem:[%s12] sm:$0x1]
    %v944 = vsel %vm132, %v940, 0.0
    %945 = vadd.xlane.f32.xlu0 %v944
    %v946 = vpop.xlane.xlu0 %945
    %v947 = vsel %vm132, %v941, 0.0
    %948 = vadd.xlane.f32.xlu0 %v947
    %v949 = vpop.xlane.xlu0 %948
    %v950 = vmul.f32 %v946, %v710
    %v951 = vmul.f32 %v949, %v710
    %v952 = vsub.f32 %v940, %v950
    %v953 = vsub.f32 %v941, %v951
    %v954 = vmul.f32 %v952, %v952
    %v955 = vmul.f32 %v953, %v953
    %v956 = vsel %vm132, %v954, 0.0
    %957 = vadd.xlane.f32.xlu0 %v956
    %v958 = vpop.xlane.xlu0 %957
    %v959 = vsel %vm132, %v955, 0.0
    %960 = vadd.xlane.f32.xlu0 %v959
    %v961 = vpop.xlane.xlu0 %960
    %v962 = vmul.f32 %v958, %v710
    %v963 = vmul.f32 %v961, %v710
    %v964 = vadd.f32 %v962, 1e-05
    %v965 = vadd.f32 %v963, 1e-05
    %v966 = vrsqrt.pop %v964
    %v967 = vmul.f32 %v966, %v964
    %v968 = vmul.f32 %v967, %v966
    %v969 = vmul.f32 0.5, %v968
    %v970 = vsub.f32 1.5, %v969
    %v971 = vmul.f32 %v966, %v970
    %vm972 = vweird.f32 %v964
    %vm973 = vweird.f32 %v966
    %vm974 = vmor %vm972, %vm973
    %v975 = vsel %vm974, %v966, %v971
    %v976 = vrsqrt.pop %v965
    %v977 = vmul.f32 %v976, %v965
    %v978 = vmul.f32 %v977, %v976
    %v979 = vmul.f32 0.5, %v978
    %v980 = vsub.f32 1.5, %v979
    %v981 = vmul.f32 %v976, %v980
    %vm982 = vweird.f32 %v965
    %vm983 = vweird.f32 %v976
    %vm984 = vmor %vm982, %vm983
    %v985 = vsel %vm984, %v976, %v981
    %v986 = vmul.f32 %v952, %v975
    %v987 = vmul.f32 %v953, %v985
    %v989 = vperm.slane %v942, 0
    %v991 = vmul.f32 %v986, %v989
    %v992 = vmul.f32 %v987, %v989
    %v994 = vperm.slane %v943, 0
    %v996 = vadd.f32 %v991, %v994
    %v997 = vadd.f32 %v992, %v994
    %v998 = vrot.slane %v996, 4
    %v999 = vsel %vm71, 0.0, %v998
    %v1001 = vunpack.c.l.s4 1983009808
    %v1002 = vunpack.c.0.s8 %v1001
    %v1003 = vperm.slane %v996, %v1002
    %v1005 = vunpack.c.l.s4 1983009808
    %v1006 = vunpack.c.0.s8 %v1005
    %v1007 = vperm.slane %v999, %v1006
    %v1008 = vrot.slane %v997, 4
    %v1009 = vsel %vm71, 0.0, %v1008
    %v1011 = vunpack.c.l.s4 1983009808
    %v1012 = vunpack.c.0.s8 %v1011
    %v1013 = vperm.slane %v997, %v1012
    %v1015 = vunpack.c.l.s4 1983009808
    %v1016 = vunpack.c.0.s8 %v1015
    %v1017 = vperm.slane %v1009, %v1016
    %v1018 = vrot.slane %v1013, 4
    %v1019 = vsel %vm71, %v1018, %v1003
    %v1020 = vrot.slane %v1003, 4
    %v1021 = vsel %vm71, %v1013, %v1020
    %v1023 = vunpack.c.l.s4 1934713408
    %v1024 = vunpack.c.0.s8 %v1023
    %v1025 = vperm.slane %v1019, %v1024
    %v1027 = vunpack.c.l.s4 1934713408
    %v1028 = vunpack.c.0.s8 %v1027
    %v1029 = vperm.slane %v1021, %v1028
    %v1030 = vrot.slane %v1017, 4
    %v1031 = vsel %vm71, %v1030, %v1007
    %v1032 = vrot.slane %v1007, 4
    %v1033 = vsel %vm71, %v1017, %v1032
    %v1035 = vunpack.c.l.s4 1934713408
    %v1036 = vunpack.c.0.s8 %v1035
    %v1037 = vperm.slane %v1031, %v1036
    %v1039 = vunpack.c.l.s4 1934713408
    %v1040 = vunpack.c.0.s8 %v1039
    %v1041 = vperm.slane %v1033, %v1040
    %v1042 = vrot.slane %v1025, 4
    %v1043 = vsel %vm71, 0.0, %v1042
    %v1044 = vrot.slane %v1029, 4
    %v1045 = vsel %vm71, 0.0, %v1044
    %v1046 = vrot.slane %v1037, 4
    %v1047 = vsel %vm71, 0.0, %v1046
    %v1048 = vrot.slane %v1041, 4
    %v1049 = vsel %vm71, 0.0, %v1048
    %vm1050 = vcmask 254976
    %1051 = vst.msk [vmem:[#allocation5] sm:$0x3] %vm1050, %v1025
    %1052 = vst.msk [vmem:[#allocation5 + $0x2] sm:$0x3] %vm1050, %v1043
    %1053 = vst.msk [vmem:[#allocation5 + $0x4] sm:$0x3] %vm1050, %v1029
    %1054 = vst.msk [vmem:[#allocation5 + $0x6] sm:$0x3] %vm1050, %v1045
    %1055 = vst.msk [vmem:[#allocation5 + $0x8] sm:$0x3] %vm1050, %v1037
    %1056 = vst.msk [vmem:[#allocation5 + $0xa] sm:$0x3] %vm1050, %v1047
    %1057 = vst.msk [vmem:[#allocation5 + $0xc] sm:$0x3] %vm1050, %v1041
    %1058 = vst.msk [vmem:[#allocation5 + $0xe] sm:$0x3] %vm1050, %v1049
    // Predicated region
    $region58: #{tpu_custom_call.1} parent=1 // pred_check
      _
    $region59: #{tpu_custom_call.1} parent=1 // pred_check_branch
      %1060 = sbr.rel (0) target = $region61
    $region60: #{tpu_custom_call.1} parent=1 // pred_region
      %1062 = vsyncadd [#allocation4], 0
      %s1063 = sshll.u32 [#allocation5], 4
      %s1064 = int_to_ptr.vmem [resolvable:$true] %s1063
      %s1065 = sshll.u32 %s13, 4
      %s1066 = int_to_ptr.hbm [resolvable:$true] %s1065
      %1071 = dma.vmem_to_hbm [thread:$0]  %s1064, 256, %s1066, [#allocation4], 32, 32, 2
    $region61: #{tpu_custom_call.1} parent=1 // pred_fallthru
      _
    // Predicated region
    $region62: #{tpu_custom_call.1} parent=1 // pred_check
      _
    $region63: #{tpu_custom_call.1} parent=1 // pred_check_branch
      %1073 = sbr.rel (0) target = $region65
    $region64: #{tpu_custom_call.1} parent=1 // pred_region
      %1075 = dma.done [#allocation4], 256
    $region65: #{tpu_custom_call.1} parent=1 // pred_fallthru
      _
    %1076 = vsyncpa [#allocation3], 1
    %1077 = vsyncpa [#allocation4], 1

// kernel: tpu_custom_call.1
$region0: #{tpu_custom_call.1}
  #allocation0 [shape = 'u32[]', space=smem, size = 0x4, offset = 0x4, fixed_abs, tag = 'smem constant byte address 0x4 - core index']
  #allocation1 [shape = 'u32[72,128]{1,0:T(1,128)}', space=vmem, size = 0x9000, scoped, tag = 'internal scratch']
  %s0 = inlined_call_operand.vmem [shape: f32[8,2,32], index: 0, kind: input, shape index: {}]
  %s1 = inlined_call_operand.vmem [shape: bf16[32,96], index: 1, kind: input, shape index: {}]
  %s2 = inlined_call_operand.vmem [shape: f32[1,96], index: 2, kind: input, shape index: {}]
  %s3 = inlined_call_operand.vmem [shape: bf16[32,32], index: 3, kind: input, shape index: {}]
  %s4 = inlined_call_operand.vmem [shape: f32[1,32], index: 4, kind: input, shape index: {}]
  %s5 = inlined_call_operand.vmem [shape: f32[1,32], index: 5, kind: input, shape index: {}]
  %s6 = inlined_call_operand.vmem [shape: f32[1,32], index: 6, kind: input, shape index: {}]
  %s7 = inlined_call_operand.hbm [shape: bf16[32,64], index: 7, kind: input, shape index: {}]
  %s8 = inlined_call_operand.vmem [shape: f32[1,64], index: 8, kind: input, shape index: {}]
  %s9 = inlined_call_operand.vmem [shape: bf16[64,32], index: 9, kind: input, shape index: {}]
  %s10 = inlined_call_operand.vmem [shape: f32[1,32], index: 10, kind: input, shape index: {}]
  %s11 = inlined_call_operand.vmem [shape: f32[1,32], index: 11, kind: input, shape index: {}]
  %s12 = inlined_call_operand.vmem [shape: f32[1,32], index: 12, kind: input, shape index: {}]
  %s13 = inlined_call_operand.hbm [shape: f32[8,2,32], index: 13, kind: output, shape index: {}]
  %s14 = sld [smem:[#allocation0]]
  $region66: #{tpu_custom_call.1} parent=0
    _
  %s16 = ssub.s32 1, %s14
  %s17 = scalar_select 0, %s16, %s14
  $region1: #{tpu_custom_call.1} parent=0
    #allocation2 [shape = 'u8[8192]{0}', space=vmem, size = 0x2000, scoped, tag = 'input window, operand 7, single buffered']
    #allocation3 [shape = 's32[1]{0}', space=sflag, size = 0x4, scoped, tag = 'scoped memory for tpu_custom_call.1']
    #allocation4 [shape = 's32[1]{0}', space=sflag, size = 0x4, scoped, tag = 'scoped memory for tpu_custom_call.1']
    #allocation5 [shape = 'u8[8192]{0}', space=vmem, size = 0x2000, scoped, tag = 'output window, operand 0, single buffered']
    %18 = vsyncpa [#allocation3], 0
    %19 = vsyncpa [#allocation4], 0
    // Predicated region
    $region2: #{tpu_custom_call.1} parent=1 // pred_check
      _
    $region3: #{tpu_custom_call.1} parent=1 // pred_check_branch
      %21 = sbr.rel (0) target = $region5
    $region4: #{tpu_custom_call.1} parent=1 // pred_region
      _
    $region5: #{tpu_custom_call.1} parent=1 // pred_fallthru
      _
    // Predicated region
    $region6: #{tpu_custom_call.1} parent=1 // pred_check
      _
    $region7: #{tpu_custom_call.1} parent=1 // pred_check_branch
      %23 = sbr.rel (0) target = $region9
    $region8: #{tpu_custom_call.1} parent=1 // pred_region
      _
    $region9: #{tpu_custom_call.1} parent=1 // pred_fallthru
      _
    // Predicated region
    $region10: #{tpu_custom_call.1} parent=1 // pred_check
      _
    $region11: #{tpu_custom_call.1} parent=1 // pred_check_branch
      %25 = sbr.rel (0) target = $region13
    $region12: #{tpu_custom_call.1} parent=1 // pred_region
      _
    $region13: #{tpu_custom_call.1} parent=1 // pred_fallthru
      _
    // Predicated region
    $region14: #{tpu_custom_call.1} parent=1 // pred_check
      _
    $region15: #{tpu_custom_call.1} parent=1 // pred_check_branch
      %27 = sbr.rel (0) target = $region17
    $region16: #{tpu_custom_call.1} parent=1 // pred_region
      _
    $region17: #{tpu_custom_call.1} parent=1 // pred_fallthru
      _
    // Predicated region
    $region18: #{tpu_custom_call.1} parent=1 // pred_check
      _
    $region19: #{tpu_custom_call.1} parent=1 // pred_check_branch
      %29 = sbr.rel (0) target = $region21
    $region20: #{tpu_custom_call.1} parent=1 // pred_region
      _
    $region21: #{tpu_custom_call.1} parent=1 // pred_fallthru
      _
    // Predicated region
    $region22: #{tpu_custom_call.1} parent=1 // pred_check
      _
    $region23: #{tpu_custom_call.1} parent=1 // pred_check_branch
      %31 = sbr.rel (0) target = $region25
    $region24: #{tpu_custom_call.1} parent=1 // pred_region
      _
    $region25: #{tpu_custom_call.1} parent=1 // pred_fallthru
      _
    // Predicated region
    $region26: #{tpu_custom_call.1} parent=1 // pred_check
      _
    $region27: #{tpu_custom_call.1} parent=1 // pred_check_branch
      %33 = sbr.rel (0) target = $region29
    $region28: #{tpu_custom_call.1} parent=1 // pred_region
      _
    $region29: #{tpu_custom_call.1} parent=1 // pred_fallthru
      _
    // Predicated region
    $region30: #{tpu_custom_call.1} parent=1 // pred_check
      _
    $region31: #{tpu_custom_call.1} parent=1 // pred_check_branch
      %35 = sbr.rel (0) target = $region33
    $region32: #{tpu_custom_call.1} parent=1 // pred_region
      %37 = vsyncadd [#allocation3], 0
      %s38 = sshll.u32 %s7, 4
      %s39 = int_to_ptr.hbm [resolvable:$true] %s38
      %s40 = sshll.u32 [#allocation2], 4
      %s41 = int_to_ptr.vmem [resolvable:$true] %s40
      %46 = dma.hbm_to_vmem [thread:$0]  %s39, 256, %s41, [#allocation3], 64, 64, 4
    $region33: #{tpu_custom_call.1} parent=1 // pred_fallthru
      _
    // Predicated region
    $region34: #{tpu_custom_call.1} parent=1 // pred_check
      _
    $region35: #{tpu_custom_call.1} parent=1 // pred_check_branch
      %48 = sbr.rel (0) target = $region37
    $region36: #{tpu_custom_call.1} parent=1 // pred_region
      _
    $region37: #{tpu_custom_call.1} parent=1 // pred_fallthru
      _
    // Predicated region
    $region38: #{tpu_custom_call.1} parent=1 // pred_check
      _
    $region39: #{tpu_custom_call.1} parent=1 // pred_check_branch
      %50 = sbr.rel (0) target = $region41
    $region40: #{tpu_custom_call.1} parent=1 // pred_region
      _
    $region41: #{tpu_custom_call.1} parent=1 // pred_fallthru
      _
    // Predicated region
    $region42: #{tpu_custom_call.1} parent=1 // pred_check
      _
    $region43: #{tpu_custom_call.1} parent=1 // pred_check_branch
      %52 = sbr.rel (0) target = $region45
    $region44: #{tpu_custom_call.1} parent=1 // pred_region
      _
    $region45: #{tpu_custom_call.1} parent=1 // pred_fallthru
      _
    // Predicated region
    $region46: #{tpu_custom_call.1} parent=1 // pred_check
      _
    $region47: #{tpu_custom_call.1} parent=1 // pred_check_branch
      %54 = sbr.rel (0) target = $region49
    $region48: #{tpu_custom_call.1} parent=1 // pred_region
      _
    $region49: #{tpu_custom_call.1} parent=1 // pred_fallthru
      _
    // Predicated region
    $region50: #{tpu_custom_call.1} parent=1 // pred_check
      _
    $region51: #{tpu_custom_call.1} parent=1 // pred_check_branch
      %56 = sbr.rel (0) target = $region53
    $region52: #{tpu_custom_call.1} parent=1 // pred_region
      _
    $region53: #{tpu_custom_call.1} parent=1 // pred_fallthru
      _
    // Predicated region
    $region54: #{tpu_custom_call.1} parent=1 // pred_check
      _
    $region55: #{tpu_custom_call.1} parent=1 // pred_check_branch
      %58 = sbr.rel (0) target = $region57
    $region56: #{tpu_custom_call.1} parent=1 // pred_region
      %60 = dma.done [#allocation3], 256
    $region57: #{tpu_custom_call.1} parent=1 // pred_fallthru
      _
    %v62 = vld [vmem:[%s0] sm:$0x3]
    %v63 = vld [vmem:[%s0 + $0x2] sm:$0x3]
    %v64 = vld [vmem:[%s0 + $0x4] sm:$0x3]
    %v65 = vld [vmem:[%s0 + $0x6] sm:$0x3]
    %v66 = vld [vmem:[%s0 + $0x8] sm:$0x3]
    %v67 = vld [vmem:[%s0 + $0xa] sm:$0x3]
    %v68 = vld [vmem:[%s0 + $0xc] sm:$0x3]
    %v69 = vld [vmem:[%s0 + $0xe] sm:$0x3]
    %v70 = vrot.slane %v64, 4
    %vm71 = vcmask 1047556
    %v72 = vsel %vm71, %v70, %v62
    %v74 = vunpack.c.l.s4 1983009808
    %v75 = vunpack.c.0.s8 %v74
    %v76 = vperm.slane %v72, %v75
    %v77 = vrot.slane %v65, 4
    %v78 = vsel %vm71, %v77, %v63
    %v80 = vunpack.c.l.s4 1983009808
    %v81 = vunpack.c.0.s8 %v80
    %v82 = vperm.slane %v78, %v81
    %v83 = vrot.slane %v68, 4
    %v84 = vsel %vm71, %v83, %v66
    %v86 = vunpack.c.l.s4 1983009808
    %v87 = vunpack.c.0.s8 %v86
    %v88 = vperm.slane %v84, %v87
    %v89 = vrot.slane %v69, 4
    %v90 = vsel %vm71, %v89, %v67
    %v92 = vunpack.c.l.s4 1983009808
    %v93 = vunpack.c.0.s8 %v92
    %v94 = vperm.slane %v90, %v93
    %v95 = vrot.slane %v82, 4
    %v96 = vsel %vm71, %v95, %v76
    %v98 = vunpack.c.l.s4 1934713408
    %v99 = vunpack.c.0.s8 %v98
    %v100 = vperm.slane %v96, %v99
    %v101 = vrot.slane %v94, 4
    %v102 = vsel %vm71, %v101, %v88
    %v104 = vunpack.c.l.s4 1934713408
    %v105 = vunpack.c.0.s8 %v104
    %v106 = vperm.slane %v102, %v105
    %v107 = vrot.slane %v106, 4
    %v108 = vsel %vm71, %v107, %v100
    %v109 = vrot.slane %v100, 4
    %v110 = vsel %vm71, %v106, %v109
    %v111 = vpack.c.bf16 %v110, %v108
    %v112 = vld [vmem:[%s1] sm:$0xf]
    %v113 = vld [vmem:[%s1 + $0x4] sm:$0xf]
    %v114 = vld [vmem:[%s1 + $0x8] sm:$0xf]
    %v115 = vld [vmem:[%s1 + $0xc] sm:$0xf]
    %v116 = vld [vmem:[%s2] sm:$0x1]
    %v118 = vperm.slane %v116, 0
    %v124 = vunpack.c.l.b16 %v112
    %v125 = vunpack.c.l.b16 %v113
    %v126 = vunpack.c.l.b16 %v114
    %v127 = vunpack.c.l.b16 %v115
    %v128 = vpack.c.b16 %v125, %v124
    %v129 = vpack.c.b16 %v127, %v126
    %vm132 = vcmask 261120
    %v134 = vsel %vm132, %v111, 0
    %136 = vmatpush.bf16.msra.mxu0 0
    %137 = vmatpush.bf16.msra.mxu0 0
    %138 = vmatpush.bf16.msra.mxu0 0
    %139 = vmatpush.bf16.msra.mxu0 0
    %140 = vmatpush.bf16.msra.mxu0 0
    %141 = vmatpush.bf16.msra.mxu0 0
    %142 = vmatpush.bf16.msra.mxu0 %v129
    %143 = vmatpush.bf16.msra.mxu0 %v128
    %144 = vmatmul.bf16.gmra.mxu0 %v134
    %v145 = vpop.f32.mrf.mxu0
    %v146 = vadd.f32 %v118, %v145
    %v147 = vpop.f32.mrf.mxu0
    %v148 = vadd.f32 %v118, %v147
    %149 = vdwg.mxu0
    %v150 = vpack.c.bf16 %v146, %v146
    %v151 = vpack.c.bf16 %v148, %v148
    %154 = vrot.lane.b32.xlu0 %v150, 120
    %v155 = vpop.permute.xlu0 %154
    %156 = vrot.lane.b32.xlu0 %v151, 120
    %v157 = vpop.permute.xlu0 %156
    %158 = vrot.lane.b32.xlu0 %v150, 112
    %v159 = vpop.permute.xlu0 %158
    %160 = vrot.lane.b32.xlu0 %v151, 112
    %v161 = vpop.permute.xlu0 %160
    %162 = vrot.lane.b32.xlu0 %v150, 104
    %v163 = vpop.permute.xlu0 %162
    %164 = vrot.lane.b32.xlu0 %v151, 104
    %v165 = vpop.permute.xlu0 %164
    %v166 = vunpack.c.l.b16 %v150
    %v167 = vpack.c.b16 %v166, %v166
    %168 = vrot.lane.b32.xlu0 %v167, 96
    %v169 = vpop.permute.xlu0 %168
    %vm170 = vcmask 64512
    %v172 = vsel %vm170, %v150, 0
    %v175 = vsel %vm170, %v169, 0
    %177 = vmatpush.bf16.xpose.msra.mxu0 0
    %178 = vmatpush.bf16.xpose.msra.mxu0 0
    %179 = vmatpush.bf16.xpose.msra.mxu0 0
    %180 = vmatpush.bf16.xpose.msra.mxu0 0
    %181 = vmatpush.bf16.xpose.msra.mxu0 0
    %182 = vmatpush.bf16.xpose.msra.mxu0 0
    %183 = vmatpush.bf16.xpose.msra.mxu0 0
    %184 = vmatpush.bf16.xpose.msra.mxu0 %v175
    %185 = vmatmul.bf16.gmra.mxu0 %v172
    %v186 = vpop.f32.mrf.mxu0
    %v187 = vadd.f32 0.0, %v186
    %v188 = vpop.f32.mrf.mxu0
    %189 = vdwg.mxu0
    %v190 = vunpack.c.l.b16 %v151
    %v191 = vpack.c.b16 %v190, %v190
    %192 = vrot.lane.b32.xlu0 %v191, 96
    %v193 = vpop.permute.xlu0 %192
    %v195 = vsel %vm170, %v151, 0
    %v198 = vsel %vm170, %v193, 0
    %200 = vmatpush.bf16.xpose.msra.mxu0 0
    %201 = vmatpush.bf16.xpose.msra.mxu0 0
    %202 = vmatpush.bf16.xpose.msra.mxu0 0
    %203 = vmatpush.bf16.xpose.msra.mxu0 0
    %204 = vmatpush.bf16.xpose.msra.mxu0 0
    %205 = vmatpush.bf16.xpose.msra.mxu0 0
    %206 = vmatpush.bf16.xpose.msra.mxu0 0
    %207 = vmatpush.bf16.xpose.msra.mxu0 %v198
    %208 = vmatmul.bf16.gmra.mxu0 %v195
    %v209 = vpop.f32.mrf.mxu0
    %v210 = vadd.f32 0.0, %v209
    %v211 = vpop.f32.mrf.mxu0
    %212 = vdwg.mxu0
    %v213 = vunpack.c.l.b16 %v155
    %v214 = vpack.c.b16 %v213, %v213
    %215 = vrot.lane.b32.xlu0 %v214, 96
    %v216 = vpop.permute.xlu0 %215
    %v218 = vsel %vm170, %v155, 0
    %v221 = vsel %vm170, %v216, 0
    %223 = vmatpush.bf16.xpose.msra.mxu0 0
    %224 = vmatpush.bf16.xpose.msra.mxu0 0
    %225 = vmatpush.bf16.xpose.msra.mxu0 0
    %226 = vmatpush.bf16.xpose.msra.mxu0 0
    %227 = vmatpush.bf16.xpose.msra.mxu0 0
    %228 = vmatpush.bf16.xpose.msra.mxu0 0
    %229 = vmatpush.bf16.xpose.msra.mxu0 0
    %230 = vmatpush.bf16.xpose.msra.mxu0 %v221
    %231 = vmatmul.bf16.gmra.mxu0 %v218
    %v232 = vpop.f32.mrf.mxu0
    %v233 = vadd.f32 0.0, %v232
    %v234 = vpop.f32.mrf.mxu0
    %235 = vdwg.mxu0
    %v236 = vunpack.c.l.b16 %v157
    %v237 = vpack.c.b16 %v236, %v236
    %238 = vrot.lane.b32.xlu0 %v237, 96
    %v239 = vpop.permute.xlu0 %238
    %v241 = vsel %vm170, %v157, 0
    %v244 = vsel %vm170, %v239, 0
    %246 = vmatpush.bf16.xpose.msra.mxu0 0
    %247 = vmatpush.bf16.xpose.msra.mxu0 0
    %248 = vmatpush.bf16.xpose.msra.mxu0 0
    %249 = vmatpush.bf16.xpose.msra.mxu0 0
    %250 = vmatpush.bf16.xpose.msra.mxu0 0
    %251 = vmatpush.bf16.xpose.msra.mxu0 0
    %252 = vmatpush.bf16.xpose.msra.mxu0 0
    %253 = vmatpush.bf16.xpose.msra.mxu0 %v244
    %254 = vmatmul.bf16.gmra.mxu0 %v241
    %v255 = vpop.f32.mrf.mxu0
    %v256 = vadd.f32 0.0, %v255
    %v257 = vpop.f32.mrf.mxu0
    %258 = vdwg.mxu0
    %v259 = vunpack.c.l.b16 %v159
    %v260 = vpack.c.b16 %v259, %v259
    %261 = vrot.lane.b32.xlu0 %v260, 96
    %v262 = vpop.permute.xlu0 %261
    %v264 = vsel %vm170, %v159, 0
    %v267 = vsel %vm170, %v262, 0
    %269 = vmatpush.bf16.xpose.msra.mxu0 0
    %270 = vmatpush.bf16.xpose.msra.mxu0 0
    %271 = vmatpush.bf16.xpose.msra.mxu0 0
    %272 = vmatpush.bf16.xpose.msra.mxu0 0
    %273 = vmatpush.bf16.xpose.msra.mxu0 0
    %274 = vmatpush.bf16.xpose.msra.mxu0 0
    %275 = vmatpush.bf16.xpose.msra.mxu0 0
    %276 = vmatpush.bf16.xpose.msra.mxu0 %v267
    %277 = vmatmul.bf16.gmra.mxu0 %v264
    %v278 = vpop.f32.mrf.mxu0
    %v279 = vadd.f32 0.0, %v278
    %v280 = vpop.f32.mrf.mxu0
    %281 = vdwg.mxu0
    %v282 = vunpack.c.l.b16 %v161
    %v283 = vpack.c.b16 %v282, %v282
    %284 = vrot.lane.b32.xlu0 %v283, 96
    %v285 = vpop.permute.xlu0 %284
    %v287 = vsel %vm170, %v161, 0
    %v290 = vsel %vm170, %v285, 0
    %292 = vmatpush.bf16.xpose.msra.mxu0 0
    %293 = vmatpush.bf16.xpose.msra.mxu0 0
    %294 = vmatpush.bf16.xpose.msra.mxu0 0
    %295 = vmatpush.bf16.xpose.msra.mxu0 0
    %296 = vmatpush.bf16.xpose.msra.mxu0 0
    %297 = vmatpush.bf16.xpose.msra.mxu0 0
    %298 = vmatpush.bf16.xpose.msra.mxu0 0
    %299 = vmatpush.bf16.xpose.msra.mxu0 %v290
    %300 = vmatmul.bf16.gmra.mxu0 %v287
    %v301 = vpop.f32.mrf.mxu0
    %v302 = vadd.f32 0.0, %v301
    %v303 = vpop.f32.mrf.mxu0
    %304 = vdwg.mxu0
    %v305 = vunpack.c.l.b16 %v163
    %v306 = vpack.c.b16 %v305, %v305
    %307 = vrot.lane.b32.xlu0 %v306, 96
    %v308 = vpop.permute.xlu0 %307
    %v310 = vsel %vm170, %v163, 0
    %v313 = vsel %vm170, %v308, 0
    %315 = vmatpush.bf16.xpose.msra.mxu0 0
    %316 = vmatpush.bf16.xpose.msra.mxu0 0
    %317 = vmatpush.bf16.xpose.msra.mxu0 0
    %318 = vmatpush.bf16.xpose.msra.mxu0 0
    %319 = vmatpush.bf16.xpose.msra.mxu0 0
    %320 = vmatpush.bf16.xpose.msra.mxu0 0
    %321 = vmatpush.bf16.xpose.msra.mxu0 0
    %322 = vmatpush.bf16.xpose.msra.mxu0 %v313
    %323 = vmatmul.bf16.gmra.mxu0 %v310
    %v324 = vpop.f32.mrf.mxu0
    %v325 = vadd.f32 0.0, %v324
    %v326 = vpop.f32.mrf.mxu0
    %327 = vdwg.mxu0
    %v328 = vunpack.c.l.b16 %v165
    %v329 = vpack.c.b16 %v328, %v328
    %330 = vrot.lane.b32.xlu0 %v329, 96
    %v331 = vpop.permute.xlu0 %330
    %v333 = vsel %vm170, %v165, 0
    %v336 = vsel %vm170, %v331, 0
    %338 = vmatpush.bf16.xpose.msra.mxu0 0
    %339 = vmatpush.bf16.xpose.msra.mxu0 0
    %340 = vmatpush.bf16.xpose.msra.mxu0 0
    %341 = vmatpush.bf16.xpose.msra.mxu0 0
    %342 = vmatpush.bf16.xpose.msra.mxu0 0
    %343 = vmatpush.bf16.xpose.msra.mxu0 0
    %344 = vmatpush.bf16.xpose.msra.mxu0 0
    %345 = vmatpush.bf16.xpose.msra.mxu0 %v336
    %346 = vmatmul.bf16.gmra.mxu0 %v333
    %v347 = vpop.f32.mrf.mxu0
    %v348 = vadd.f32 0.0, %v347
    %v349 = vpop.f32.mrf.mxu0
    %350 = vdwg.mxu0
    %v351 = vmul.f32 %v187, 0.35355338
    %v352 = vmul.f32 %v210, 0.35355338
    %v353 = vmul.f32 %v233, 0.35355338
    %v354 = vmul.f32 %v256, 0.35355338
    %v355 = vmul.f32 %v279, 0.35355338
    %v356 = vmul.f32 %v302, 0.35355338
    %v357 = vmul.f32 %v325, 0.35355338
    %v358 = vmul.f32 %v348, 0.35355338
    %v359 = vsel %vm170, %v351, -inf
    %360 = vmax.xlane.f32.xlu0 %v359
    %v361 = vpop.xlane.xlu0 %360
    %v362 = vsel %vm170, %v352, -inf
    %363 = vmax.xlane.f32.xlu0 %v362
    %v364 = vpop.xlane.xlu0 %363
    %v365 = vsel %vm170, %v353, -inf
    %366 = vmax.xlane.f32.xlu0 %v365
    %v367 = vpop.xlane.xlu0 %366
    %v368 = vsel %vm170, %v354, -inf
    %369 = vmax.xlane.f32.xlu0 %v368
    %v370 = vpop.xlane.xlu0 %369
    %v371 = vsel %vm170, %v355, -inf
    %372 = vmax.xlane.f32.xlu0 %v371
    %v373 = vpop.xlane.xlu0 %372
    %v374 = vsel %vm170, %v356, -inf
    %375 = vmax.xlane.f32.xlu0 %v374
    %v376 = vpop.xlane.xlu0 %375
    %v377 = vsel %vm170, %v357, -inf
    %378 = vmax.xlane.f32.xlu0 %v377
    %v379 = vpop.xlane.xlu0 %378
    %v380 = vsel %vm170, %v358, -inf
    %381 = vmax.xlane.f32.xlu0 %v380
    %v382 = vpop.xlane.xlu0 %381
    %v383 = vsub.f32 %v351, %v361
    %v384 = vsub.f32 %v352, %v364
    %v385 = vsub.f32 %v353, %v367
    %v386 = vsub.f32 %v354, %v370
    %v387 = vsub.f32 %v355, %v373
    %v388 = vsub.f32 %v356, %v376
    %v389 = vsub.f32 %v357, %v379
    %v390 = vsub.f32 %v358, %v382
    %v391 = vmul.f32 %v383, 1.442695
    %v392 = vpow.pop %v391
    %v393 = vmul.f32 %v384, 1.442695
    %v394 = vpow.pop %v393
    %v395 = vmul.f32 %v385, 1.442695
    %v396 = vpow.pop %v395
    %v397 = vmul.f32 %v386, 1.442695
    %v398 = vpow.pop %v397
    %v399 = vmul.f32 %v387, 1.442695
    %v400 = vpow.pop %v399
    %v401 = vmul.f32 %v388, 1.442695
    %v402 = vpow.pop %v401
    %v403 = vmul.f32 %v389, 1.442695
    %v404 = vpow.pop %v403
    %v405 = vmul.f32 %v390, 1.442695
    %v406 = vpow.pop %v405
    %v407 = vsel %vm170, %v392, 0.0
    %408 = vadd.xlane.f32.xlu0 %v407
    %v409 = vpop.xlane.xlu0 %408
    %v410 = vsel %vm170, %v394, 0.0
    %411 = vadd.xlane.f32.xlu0 %v410
    %v412 = vpop.xlane.xlu0 %411
    %v413 = vsel %vm170, %v396, 0.0
    %414 = vadd.xlane.f32.xlu0 %v413
    %v415 = vpop.xlane.xlu0 %414
    %v416 = vsel %vm170, %v398, 0.0
    %417 = vadd.xlane.f32.xlu0 %v416
    %v418 = vpop.xlane.xlu0 %417
    %v419 = vsel %vm170, %v400, 0.0
    %420 = vadd.xlane.f32.xlu0 %v419
    %v421 = vpop.xlane.xlu0 %420
    %v422 = vsel %vm170, %v402, 0.0
    %423 = vadd.xlane.f32.xlu0 %v422
    %v424 = vpop.xlane.xlu0 %423
    %v425 = vsel %vm170, %v404, 0.0
    %426 = vadd.xlane.f32.xlu0 %v425
    %v427 = vpop.xlane.xlu0 %426
    %v428 = vsel %vm170, %v406, 0.0
    %429 = vadd.xlane.f32.xlu0 %v428
    %v430 = vpop.xlane.xlu0 %429
    %v431 = vrcp.pop %v409
    %v432 = vrcp.pop %v412
    %v433 = vrcp.pop %v415
    %v434 = vrcp.pop %v418
    %v435 = vrcp.pop %v421
    %v436 = vrcp.pop %v424
    %v437 = vrcp.pop %v427
    %v438 = vrcp.pop %v430
    %v439 = vmul.f32 %v392, %v431
    %v440 = vmul.f32 %v394, %v432
    %v441 = vmul.f32 %v396, %v433
    %v442 = vmul.f32 %v398, %v434
    %v443 = vmul.f32 %v400, %v435
    %v444 = vmul.f32 %v402, %v436
    %v445 = vmul.f32 %v404, %v437
    %v446 = vmul.f32 %v406, %v438
    %v447 = vpack.c.bf16 %v439, %v439
    %v448 = vpack.c.bf16 %v440, %v440
    %v449 = vpack.c.bf16 %v441, %v441
    %v450 = vpack.c.bf16 %v442, %v442
    %v451 = vpack.c.bf16 %v443, %v443
    %v452 = vpack.c.bf16 %v444, %v444
    %v453 = vpack.c.bf16 %v445, %v445
    %v454 = vpack.c.bf16 %v446, %v446
    %455 = vrot.lane.b32.xlu0 %v167, 64
    %v456 = vpop.permute.xlu0 %455
    %v458 = vsel %vm170, %v447, 0
    %vm460 = vcmask 1043456
    %v462 = vsel %vm460, %v456, 0
    %464 = vmatpush.bf16.msra.mxu0 0
    %465 = vmatpush.bf16.msra.mxu0 0
    %466 = vmatpush.bf16.msra.mxu0 0
    %467 = vmatpush.bf16.msra.mxu0 0
    %468 = vmatpush.bf16.msra.mxu0 0
    %469 = vmatpush.bf16.msra.mxu0 0
    %470 = vmatpush.bf16.msra.mxu0 0
    %471 = vmatpush.bf16.msra.mxu0 %v462
    %472 = vmatmul.bf16.gmra.mxu0 %v458
    %v473 = vpop.f32.mrf.mxu0
    %v474 = vadd.f32 0.0, %v473
    %v475 = vpop.f32.mrf.mxu0
    %476 = vdwg.mxu0
    %477 = vrot.lane.b32.xlu0 %v191, 64
    %v478 = vpop.permute.xlu0 %477
    %v480 = vsel %vm170, %v448, 0
    %v483 = vsel %vm460, %v478, 0
    %485 = vmatpush.bf16.msra.mxu0 0
    %486 = vmatpush.bf16.msra.mxu0 0
    %487 = vmatpush.bf16.msra.mxu0 0
    %488 = vmatpush.bf16.msra.mxu0 0
    %489 = vmatpush.bf16.msra.mxu0 0
    %490 = vmatpush.bf16.msra.mxu0 0
    %491 = vmatpush.bf16.msra.mxu0 0
    %492 = vmatpush.bf16.msra.mxu0 %v483
    %493 = vmatmul.bf16.gmra.mxu0 %v480
    %v494 = vpop.f32.mrf.mxu0
    %v495 = vadd.f32 0.0, %v494
    %v496 = vpop.f32.mrf.mxu0
    %497 = vdwg.mxu0
    %498 = vrot.lane.b32.xlu0 %v214, 64
    %v499 = vpop.permute.xlu0 %498
    %v501 = vsel %vm170, %v449, 0
    %v504 = vsel %vm460, %v499, 0
    %506 = vmatpush.bf16.msra.mxu0 0
    %507 = vmatpush.bf16.msra.mxu0 0
    %508 = vmatpush.bf16.msra.mxu0 0
    %509 = vmatpush.bf16.msra.mxu0 0
    %510 = vmatpush.bf16.msra.mxu0 0
    %511 = vmatpush.bf16.msra.mxu0 0
    %512 = vmatpush.bf16.msra.mxu0 0
    %513 = vmatpush.bf16.msra.mxu0 %v504
    %514 = vmatmul.bf16.gmra.mxu0 %v501
    %v515 = vpop.f32.mrf.mxu0
    %v516 = vadd.f32 0.0, %v515
    %v517 = vpop.f32.mrf.mxu0
    %518 = vdwg.mxu0
    %519 = vrot.lane.b32.xlu0 %v237, 64
    %v520 = vpop.permute.xlu0 %519
    %v522 = vsel %vm170, %v450, 0
    %v525 = vsel %vm460, %v520, 0
    %527 = vmatpush.bf16.msra.mxu0 0
    %528 = vmatpush.bf16.msra.mxu0 0
    %529 = vmatpush.bf16.msra.mxu0 0
    %530 = vmatpush.bf16.msra.mxu0 0
    %531 = vmatpush.bf16.msra.mxu0 0
    %532 = vmatpush.bf16.msra.mxu0 0
    %533 = vmatpush.bf16.msra.mxu0 0
    %534 = vmatpush.bf16.msra.mxu0 %v525
    %535 = vmatmul.bf16.gmra.mxu0 %v522
    %v536 = vpop.f32.mrf.mxu0
    %v537 = vadd.f32 0.0, %v536
    %v538 = vpop.f32.mrf.mxu0
    %539 = vdwg.mxu0
    %540 = vrot.lane.b32.xlu0 %v260, 64
    %v541 = vpop.permute.xlu0 %540
    %v543 = vsel %vm170, %v451, 0
    %v546 = vsel %vm460, %v541, 0
    %548 = vmatpush.bf16.msra.mxu0 0
    %549 = vmatpush.bf16.msra.mxu0 0
    %550 = vmatpush.bf16.msra.mxu0 0
    %551 = vmatpush.bf16.msra.mxu0 0
    %552 = vmatpush.bf16.msra.mxu0 0
    %553 = vmatpush.bf16.msra.mxu0 0
    %554 = vmatpush.bf16.msra.mxu0 0
    %555 = vmatpush.bf16.msra.mxu0 %v546
    %556 = vmatmul.bf16.gmra.mxu0 %v543
    %v557 = vpop.f32.mrf.mxu0
    %v558 = vadd.f32 0.0, %v557
    %v559 = vpop.f32.mrf.mxu0
    %560 = vdwg.mxu0
    %561 = vrot.lane.b32.xlu0 %v283, 64
    %v562 = vpop.permute.xlu0 %561
    %v564 = vsel %vm170, %v452, 0
    %v567 = vsel %vm460, %v562, 0
    %569 = vmatpush.bf16.msra.mxu0 0
    %570 = vmatpush.bf16.msra.mxu0 0
    %571 = vmatpush.bf16.msra.mxu0 0
    %572 = vmatpush.bf16.msra.mxu0 0
    %573 = vmatpush.bf16.msra.mxu0 0
    %574 = vmatpush.bf16.msra.mxu0 0
    %575 = vmatpush.bf16.msra.mxu0 0
    %576 = vmatpush.bf16.msra.mxu0 %v567
    %577 = vmatmul.bf16.gmra.mxu0 %v564
    %v578 = vpop.f32.mrf.mxu0
    %v579 = vadd.f32 0.0, %v578
    %v580 = vpop.f32.mrf.mxu0
    %581 = vdwg.mxu0
    %582 = vrot.lane.b32.xlu0 %v306, 64
    %v583 = vpop.permute.xlu0 %582
    %v585 = vsel %vm170, %v453, 0
    %v588 = vsel %vm460, %v583, 0
    %590 = vmatpush.bf16.msra.mxu0 0
    %591 = vmatpush.bf16.msra.mxu0 0
    %592 = vmatpush.bf16.msra.mxu0 0
    %593 = vmatpush.bf16.msra.mxu0 0
    %594 = vmatpush.bf16.msra.mxu0 0
    %595 = vmatpush.bf16.msra.mxu0 0
    %596 = vmatpush.bf16.msra.mxu0 0
    %597 = vmatpush.bf16.msra.mxu0 %v588
    %598 = vmatmul.bf16.gmra.mxu0 %v585
    %v599 = vpop.f32.mrf.mxu0
    %v600 = vadd.f32 0.0, %v599
    %v601 = vpop.f32.mrf.mxu0
    %602 = vdwg.mxu0
    %603 = vrot.lane.b32.xlu0 %v329, 64
    %v604 = vpop.permute.xlu0 %603
    %v606 = vsel %vm170, %v454, 0
    %v609 = vsel %vm460, %v604, 0
    %611 = vmatpush.bf16.msra.mxu0 0
    %612 = vmatpush.bf16.msra.mxu0 0
    %613 = vmatpush.bf16.msra.mxu0 0
    %614 = vmatpush.bf16.msra.mxu0 0
    %615 = vmatpush.bf16.msra.mxu0 0
    %616 = vmatpush.bf16.msra.mxu0 0
    %617 = vmatpush.bf16.msra.mxu0 0
    %618 = vmatpush.bf16.msra.mxu0 %v609
    %619 = vmatmul.bf16.gmra.mxu0 %v606
    %v620 = vpop.f32.mrf.mxu0
    %v621 = vadd.f32 0.0, %v620
    %v622 = vpop.f32.mrf.mxu0
    %623 = vdwg.mxu0
    %626 = vrot.lane.b32.xlu0 %v516, 8
    %v627 = vpop.permute.xlu0 %626
    %628 = vrot.lane.b32.xlu0 %v537, 8
    %v629 = vpop.permute.xlu0 %628
    %634 = vrot.lane.b32.xlu0 %v558, 16
    %v635 = vpop.permute.xlu0 %634
    %636 = vrot.lane.b32.xlu0 %v579, 16
    %v637 = vpop.permute.xlu0 %636
    %642 = vrot.lane.b32.xlu0 %v600, 24
    %v643 = vpop.permute.xlu0 %642
    %644 = vrot.lane.b32.xlu0 %v621, 24
    %v645 = vpop.permute.xlu0 %644
    %v648 = vsel %vm170, %v474, %v627
    %v649 = vsel %vm170, %v495, %v629
    %vm650 = vcmask 130048
    %v651 = vsel %vm650, %v648, %v635
    %v652 = vsel %vm650, %v649, %v637
    %vm653 = vcmask 195584
    %v654 = vsel %vm653, %v651, %v643
    %v655 = vsel %vm653, %v652, %v645
    %v656 = vpack.c.bf16 %v655, %v654
    %v657 = vld [vmem:[%s3] sm:$0xf]
    %v658 = vld [vmem:[%s3 + $0x4] sm:$0xf]
    %v659 = vld [vmem:[%s3 + $0x8] sm:$0xf]
    %v660 = vld [vmem:[%s3 + $0xc] sm:$0xf]
    %v661 = vld [vmem:[%s4] sm:$0x1]
    %v663 = vperm.slane %v661, 0
    %v669 = vunpack.c.l.b16 %v657
    %v670 = vunpack.c.l.b16 %v658
    %v671 = vunpack.c.l.b16 %v659
    %v672 = vunpack.c.l.b16 %v660
    %v673 = vpack.c.b16 %v670, %v669
    %v674 = vpack.c.b16 %v672, %v671
    %v678 = vsel %vm132, %v656, 0
    %680 = vmatpush.bf16.msra.mxu0 0
    %681 = vmatpush.bf16.msra.mxu0 0
    %682 = vmatpush.bf16.msra.mxu0 0
    %683 = vmatpush.bf16.msra.mxu0 0
    %684 = vmatpush.bf16.msra.mxu0 0
    %685 = vmatpush.bf16.msra.mxu0 0
    %686 = vmatpush.bf16.msra.mxu0 %v674
    %687 = vmatpush.bf16.msra.mxu0 %v673
    %688 = vmatmul.bf16.gmra.mxu0 %v678
    %v689 = vpop.f32.mrf.mxu0
    %v690 = vadd.f32 %v663, %v689
    %v691 = vpop.f32.mrf.mxu0
    %v692 = vadd.f32 %v663, %v691
    %693 = vdwg.mxu0
    %v694 = vadd.f32 %v108, %v690
    %v695 = vadd.f32 %v110, %v692
    %v696 = vld [vmem:[%s5] sm:$0x1]
    %v697 = vld [vmem:[%s6] sm:$0x1]
    %v698 = vsel %vm132, %v694, 0.0
    %699 = vadd.xlane.f32.xlu0 %v698
    %v700 = vpop.xlane.xlu0 %699
    %v701 = vsel %vm132, %v695, 0.0
    %702 = vadd.xlane.f32.xlu0 %v701
    %v703 = vpop.xlane.xlu0 %702
    %v704 = vrcp.pop 32.0
    %v705 = vmul.f32 32.0, %v704
    %v706 = vsub.f32 1.0, %v705
    %v707 = vmul.f32 %v704, %v706
    %v708 = vadd.f32 %v704, %v707
    %vm709 = vweird.f32 %v704
    %v710 = vsel %vm709, %v704, %v708
    %v711 = vmul.f32 %v700, %v710
    %v712 = vmul.f32 %v703, %v710
    %v713 = vsub.f32 %v694, %v711
    %v714 = vsub.f32 %v695, %v712
    %v715 = vmul.f32 %v713, %v713
    %v716 = vmul.f32 %v714, %v714
    %v717 = vsel %vm132, %v715, 0.0
    %718 = vadd.xlane.f32.xlu0 %v717
    %v719 = vpop.xlane.xlu0 %718
    %v720 = vsel %vm132, %v716, 0.0
    %721 = vadd.xlane.f32.xlu0 %v720
    %v722 = vpop.xlane.xlu0 %721
    %v723 = vmul.f32 %v719, %v710
    %v724 = vmul.f32 %v722, %v710
    %v725 = vadd.f32 %v723, 1e-05
    %v726 = vadd.f32 %v724, 1e-05
    %v727 = vrsqrt.pop %v725
    %v728 = vmul.f32 %v727, %v725
    %v729 = vmul.f32 %v728, %v727
    %v730 = vmul.f32 0.5, %v729
    %v731 = vsub.f32 1.5, %v730
    %v732 = vmul.f32 %v727, %v731
    %vm733 = vweird.f32 %v725
    %vm734 = vweird.f32 %v727
    %vm735 = vmor %vm733, %vm734
    %v736 = vsel %vm735, %v727, %v732
    %v737 = vrsqrt.pop %v726
    %v738 = vmul.f32 %v737, %v726
    %v739 = vmul.f32 %v738, %v737
    %v740 = vmul.f32 0.5, %v739
    %v741 = vsub.f32 1.5, %v740
    %v742 = vmul.f32 %v737, %v741
    %vm743 = vweird.f32 %v726
    %vm744 = vweird.f32 %v737
    %vm745 = vmor %vm743, %vm744
    %v746 = vsel %vm745, %v737, %v742
    %v747 = vmul.f32 %v713, %v736
    %v748 = vmul.f32 %v714, %v746
    %v750 = vperm.slane %v696, 0
    %v752 = vmul.f32 %v747, %v750
    %v753 = vmul.f32 %v748, %v750
    %v755 = vperm.slane %v697, 0
    %v757 = vadd.f32 %v752, %v755
    %v758 = vadd.f32 %v753, %v755
    %v759 = vpack.c.bf16 %v758, %v757
    %v760 = vld [vmem:[#allocation2] sm:$0xf]
    %v761 = vld [vmem:[#allocation2 + $0x4] sm:$0xf]
    %v762 = vld [vmem:[#allocation2 + $0x8] sm:$0xf]
    %v763 = vld [vmem:[#allocation2 + $0xc] sm:$0xf]
    %v764 = vld [vmem:[%s8] sm:$0x1]
    %v766 = vperm.slane %v764, 0
    %v772 = vunpack.c.l.b16 %v760
    %v773 = vunpack.c.l.b16 %v761
    %v774 = vunpack.c.l.b16 %v762
    %v775 = vunpack.c.l.b16 %v763
    %v776 = vpack.c.b16 %v773, %v772
    %v777 = vpack.c.b16 %v775, %v774
    %v781 = vsel %vm132, %v759, 0
    %783 = vmatpush.bf16.msra.mxu0 0
    %784 = vmatpush.bf16.msra.mxu0 0
    %785 = vmatpush.bf16.msra.mxu0 0
    %786 = vmatpush.bf16.msra.mxu0 0
    %787 = vmatpush.bf16.msra.mxu0 0
    %788 = vmatpush.bf16.msra.mxu0 0
    %789 = vmatpush.bf16.msra.mxu0 %v777
    %790 = vmatpush.bf16.msra.mxu0 %v776
    %791 = vmatmul.bf16.gmra.mxu0 %v781
    %v792 = vpop.f32.mrf.mxu0
    %v793 = vadd.f32 %v766, %v792
    %v794 = vpop.f32.mrf.mxu0
    %v795 = vadd.f32 %v766, %v794
    %796 = vdwg.mxu0
    %v797 = vmul.f32 %v793, 0.5
    %v798 = vmul.f32 %v795, 0.5
    %v799 = vmul.f32 %v793, 0.70710677
    %v800 = vmul.f32 %v795, 0.70710677
    %v801 = vmul.f32 %v799, %v799
    %v802 = vmin.f32 16.0, %v801
    %v803 = vmul.f32 %v802, 2.1237322e-06
    %v804 = vadd.f32 %v803, 0.00028619796
    %v805 = vmul.f32 %v802, %v804
    %v806 = vadd.f32 %v805, 0.0036580483
    %v807 = vmul.f32 %v802, %v806
    %v808 = vadd.f32 %v807, 0.05243302
    %v809 = vmul.f32 %v802, %v808
    %v810 = vadd.f32 %v809, 0.18741608
    %v811 = vmul.f32 %v802, %v810
    %v812 = vadd.f32 %v811, 1.1283791
    %v813 = vmul.f32 %v799, %v812
    %v814 = vmul.f32 %v802, 3.8918573e-05
    %v815 = vadd.f32 %v814, 0.001143296
    %v816 = vmul.f32 %v802, %v815
    %v817 = vadd.f32 %v816, 0.014752088
    %v818 = vmul.f32 %v802, %v817
    %v819 = vadd.f32 %v818, 0.112945676
    %v820 = vmul.f32 %v802, %v819
    %v821 = vadd.f32 %v820, 0.4994258
    %v822 = vmul.f32 %v802, %v821
    %v823 = vadd.f32 %v822, 1.0
    %v824 = vrcp.pop %v823
    %v825 = vmul.f32 %v823, %v824
    %v826 = vsub.f32 1.0, %v825
    %v827 = vmul.f32 %v824, %v826
    %v828 = vadd.f32 %v824, %v827
    %vm829 = vweird.f32 %v823
    %vm830 = vweird.f32 %v824
    %vm831 = vmor %vm829, %vm830
    %v832 = vsel %vm831, %v824, %v828
    %v833 = vand.u32 2147483647, %v823
    %vm834 = vcmp.eq.f32.partialorder %v833, 8.507059e+37
    %v835 = vand.u32 %v823, 2147483648
    %v836 = vor.u32 1.1754944e-38, %v835
    %v837 = vsel %vm834, %v836, %v832
    %v838 = vmul.f32 %v813, %v837
    %v839 = vmin.f32 %v838, 1.0
    %v840 = vmax.f32 %v839, -1.0
    %v841 = vmul.f32 %v800, %v800
    %v842 = vmin.f32 16.0, %v841
    %v843 = vmul.f32 %v842, 2.1237322e-06
    %v844 = vadd.f32 %v843, 0.00028619796
    %v845 = vmul.f32 %v842, %v844
    %v846 = vadd.f32 %v845, 0.0036580483
    %v847 = vmul.f32 %v842, %v846
    %v848 = vadd.f32 %v847, 0.05243302
    %v849 = vmul.f32 %v842, %v848
    %v850 = vadd.f32 %v849, 0.18741608
    %v851 = vmul.f32 %v842, %v850
    %v852 = vadd.f32 %v851, 1.1283791
    %v853 = vmul.f32 %v800, %v852
    %v854 = vmul.f32 %v842, 3.8918573e-05
    %v855 = vadd.f32 %v854, 0.001143296
    %v856 = vmul.f32 %v842, %v855
    %v857 = vadd.f32 %v856, 0.014752088
    %v858 = vmul.f32 %v842, %v857
    %v859 = vadd.f32 %v858, 0.112945676
    %v860 = vmul.f32 %v842, %v859
    %v861 = vadd.f32 %v860, 0.4994258
    %v862 = vmul.f32 %v842, %v861
    %v863 = vadd.f32 %v862, 1.0
    %v864 = vrcp.pop %v863
    %v865 = vmul.f32 %v863, %v864
    %v866 = vsub.f32 1.0, %v865
    %v867 = vmul.f32 %v864, %v866
    %v868 = vadd.f32 %v864, %v867
    %vm869 = vweird.f32 %v863
    %vm870 = vweird.f32 %v864
    %vm871 = vmor %vm869, %vm870
    %v872 = vsel %vm871, %v864, %v868
    %v873 = vand.u32 2147483647, %v863
    %vm874 = vcmp.eq.f32.partialorder %v873, 8.507059e+37
    %v875 = vand.u32 %v863, 2147483648
    %v876 = vor.u32 1.1754944e-38, %v875
    %v877 = vsel %vm874, %v876, %v872
    %v878 = vmul.f32 %v853, %v877
    %v879 = vmin.f32 %v878, 1.0
    %v880 = vmax.f32 %v879, -1.0
    %v881 = vadd.f32 %v840, 1.0
    %v882 = vadd.f32 %v880, 1.0
    %v883 = vmul.f32 %v797, %v881
    %v884 = vmul.f32 %v798, %v882
    %v885 = vpack.c.bf16 %v884, %v883
    %v886 = vld [vmem:[%s9] sm:$0xf]
    %v887 = vld [vmem:[%s9 + $0x4] sm:$0xf]
    %v888 = vld [vmem:[%s9 + $0x8] sm:$0xf]
    %v889 = vld [vmem:[%s9 + $0xc] sm:$0xf]
    %v890 = vld [vmem:[%s9 + $0x10] sm:$0xf]
    %v891 = vld [vmem:[%s9 + $0x14] sm:$0xf]
    %v892 = vld [vmem:[%s9 + $0x18] sm:$0xf]
    %v893 = vld [vmem:[%s9 + $0x1c] sm:$0xf]
    %v894 = vld [vmem:[%s10] sm:$0x1]
    %v896 = vperm.slane %v894, 0
    %v906 = vunpack.c.l.b16 %v886
    %v907 = vunpack.c.l.b16 %v887
    %v908 = vunpack.c.l.b16 %v888
    %v909 = vunpack.c.l.b16 %v889
    %v910 = vunpack.c.l.b16 %v890
    %v911 = vunpack.c.l.b16 %v891
    %v912 = vunpack.c.l.b16 %v892
    %v913 = vunpack.c.l.b16 %v893
    %v914 = vpack.c.b16 %v907, %v906
    %v915 = vpack.c.b16 %v909, %v908
    %v916 = vpack.c.b16 %v911, %v910
    %v917 = vpack.c.b16 %v913, %v912
    %vm922 = vcmask 523264
    %v924 = vsel %vm922, %v885, 0
    %926 = vmatpush.bf16.msra.mxu0 0
    %927 = vmatpush.bf16.msra.mxu0 0
    %928 = vmatpush.bf16.msra.mxu0 0
    %929 = vmatpush.bf16.msra.mxu0 0
    %930 = vmatpush.bf16.msra.mxu0 %v917
    %931 = vmatpush.bf16.msra.mxu0 %v916
    %932 = vmatpush.bf16.msra.mxu0 %v915
    %933 = vmatpush.bf16.msra.mxu0 %v914
    %934 = vmatmul.bf16.gmra.mxu0 %v924
    %v935 = vpop.f32.mrf.mxu0
    %v936 = vadd.f32 %v896, %v935
    %v937 = vpop.f32.mrf.mxu0
    %v938 = vadd.f32 %v896, %v937
    %939 = vdwg.mxu0
    %v940 = vadd.f32 %v757, %v936
    %v941 = vadd.f32 %v758, %v938
    %v942 = vld [vmem:[%s11] sm:$0x1]
    %v943 = vld [vmem:[%s12] sm:$0x1]
    %v944 = vsel %vm132, %v940, 0.0
    %945 = vadd.xlane.f32.xlu0 %v944
    %v946 = vpop.xlane.xlu0 %945
    %v947 = vsel %vm132, %v941, 0.0
    %948 = vadd.xlane.f32.xlu0 %v947
    %v949 = vpop.xlane.xlu0 %948
    %v950 = vmul.f32 %v946, %v710
    %v951 = vmul.f32 %v949, %v710
    %v952 = vsub.f32 %v940, %v950
    %v953 = vsub.f32 %v941, %v951
    %v954 = vmul.f32 %v952, %v952
    %v955 = vmul.f32 %v953, %v953
    %v956 = vsel %vm132, %v954, 0.0
    %957 = vadd.xlane.f32.xlu0 %v956
    %v958 = vpop.xlane.xlu0 %957
    %v959 = vsel %vm132, %v955, 0.0
    %960 = vadd.xlane.f32.xlu0 %v959
    %v961 = vpop.xlane.xlu0 %960
    %v962 = vmul.f32 %v958, %v710
    %v963 = vmul.f32 %v961, %v710
    %v964 = vadd.f32 %v962, 1e-05
    %v965 = vadd.f32 %v963, 1e-05
    %v966 = vrsqrt.pop %v964
    %v967 = vmul.f32 %v966, %v964
    %v968 = vmul.f32 %v967, %v966
    %v969 = vmul.f32 0.5, %v968
    %v970 = vsub.f32 1.5, %v969
    %v971 = vmul.f32 %v966, %v970
    %vm972 = vweird.f32 %v964
    %vm973 = vweird.f32 %v966
    %vm974 = vmor %vm972, %vm973
    %v975 = vsel %vm974, %v966, %v971
    %v976 = vrsqrt.pop %v965
    %v977 = vmul.f32 %v976, %v965
    %v978 = vmul.f32 %v977, %v976
    %v979 = vmul.f32 0.5, %v978
    %v980 = vsub.f32 1.5, %v979
    %v981 = vmul.f32 %v976, %v980
    %vm982 = vweird.f32 %v965
    %vm983 = vweird.f32 %v976
    %vm984 = vmor %vm982, %vm983
    %v985 = vsel %vm984, %v976, %v981
    %v986 = vmul.f32 %v952, %v975
    %v987 = vmul.f32 %v953, %v985
    %v989 = vperm.slane %v942, 0
    %v991 = vmul.f32 %v986, %v989
    %v992 = vmul.f32 %v987, %v989
    %v994 = vperm.slane %v943, 0
    %v996 = vadd.f32 %v991, %v994
    %v997 = vadd.f32 %v992, %v994
    %v998 = vrot.slane %v996, 4
    %v999 = vsel %vm71, 0.0, %v998
    %v1001 = vunpack.c.l.s4 1983009808
    %v1002 = vunpack.c.0.s8 %v1001
    %v1003 = vperm.slane %v996, %v1002
    %v1005 = vunpack.c.l.s4 1983009808
    %v1006 = vunpack.c.0.s8 %v1005
    %v1007 = vperm.slane %v999, %v1006
    %v1008 = vrot.slane %v997, 4
    %v1009 = vsel %vm71, 0.0, %v1008
    %v1011 = vunpack.c.l.s4 1983009808
    %v1012 = vunpack.c.0.s8 %v1011
    %v1013 = vperm.slane %v997, %v1012
    %v1015 = vunpack.c.l.s4 1983009808
    %v1016 = vunpack.c.0.s8 %v1015
    %v1017 = vperm.slane %v1009, %v1016
    %v1018 = vrot.slane %v1013, 4
    %v1019 = vsel %vm71, %v1018, %v1003
    %v1020 = vrot.slane %v1003, 4
    %v1021 = vsel %vm71, %v1013, %v1020
    %v1023 = vunpack.c.l.s4 1934713408
    %v1024 = vunpack.c.0.s8 %v1023
    %v1025 = vperm.slane %v1019, %v1024
    %v1027 = vunpack.c.l.s4 1934713408
    %v1028 = vunpack.c.0.s8 %v1027
    %v1029 = vperm.slane %v1021, %v1028
    %v1030 = vrot.slane %v1017, 4
    %v1031 = vsel %vm71, %v1030, %v1007
    %v1032 = vrot.slane %v1007, 4
    %v1033 = vsel %vm71, %v1017, %v1032
    %v1035 = vunpack.c.l.s4 1934713408
    %v1036 = vunpack.c.0.s8 %v1035
    %v1037 = vperm.slane %v1031, %v1036
    %v1039 = vunpack.c.l.s4 1934713408
    %v1040 = vunpack.c.0.s8 %v1039
    %v1041 = vperm.slane %v1033, %v1040
    %v1042 = vrot.slane %v1025, 4
    %v1043 = vsel %vm71, 0.0, %v1042
    %v1044 = vrot.slane %v1029, 4
    %v1045 = vsel %vm71, 0.0, %v1044
    %v1046 = vrot.slane %v1037, 4
    %v1047 = vsel %vm71, 0.0, %v1046
    %v1048 = vrot.slane %v1041, 4
    %v1049 = vsel %vm71, 0.0, %v1048
    %vm1050 = vcmask 254976
    %1051 = vst.msk [vmem:[#allocation5] sm:$0x3] %vm1050, %v1025
    %1052 = vst.msk [vmem:[#allocation5 + $0x2] sm:$0x3] %vm1050, %v1043
    %1053 = vst.msk [vmem:[#allocation5 + $0x4] sm:$0x3] %vm1050, %v1029
    %1054 = vst.msk [vmem:[#allocation5 + $0x6] sm:$0x3] %vm1050, %v1045
    %1055 = vst.msk [vmem:[#allocation5 + $0x8] sm:$0x3] %vm1050, %v1037
    %1056 = vst.msk [vmem:[#allocation5 + $0xa] sm:$0x3] %vm1050, %v1047
    %1057 = vst.msk [vmem:[#allocation5 + $0xc] sm:$0x3] %vm1050, %v1041
    %1058 = vst.msk [vmem:[#allocation5 + $0xe] sm:$0x3] %vm1050, %v1049
    // Predicated region
    $region58: #{tpu_custom_call.1} parent=1 // pred_check
      _
    $region59: #{tpu_custom_call.1} parent=1 // pred_check_branch
      %1060 = sbr.rel (0) target = $region61
    $region60: #{tpu_custom_call.1} parent=1 // pred_region
      %1062 = vsyncadd [#allocation4], 0
      %s1063 = sshll.u32 [#allocation5], 4
      %s1064 = int_to_ptr.vmem [resolvable:$true] %s1063
      %s1065 = sshll.u32 %s13, 4
      %s1066 = int_to_ptr.hbm [resolvable:$true] %s1065
      %1071 = dma.vmem_to_hbm [thread:$0]  %s1064, 256, %s1066, [#allocation4], 32, 32, 2
    $region61: #{tpu_custom_call.1} parent=1 // pred_fallthru
      _
    // Predicated region
    $region62: #{tpu_custom_call.1} parent=1 // pred_check
      _
    $region63: #{tpu_custom_call.1} parent=1 // pred_check_branch
      %1073 = sbr.rel (0) target = $region65
    $region64: #{tpu_custom_call.1} parent=1 // pred_region
      %1075 = dma.done [#allocation4], 256
    $region65: #{tpu_custom_call.1} parent=1 // pred_fallthru
      _
    %1076 = vsyncpa [#allocation3], 1
    %1077 = vsyncpa [#allocation4], 1

</llo_original>
